<compile_context>
chip_gen: v6e
topology: v6e:2x2x1
jax: 0.10.0
libtpu: 0.0.40
codegen_flags: <defaults>
</compile_context>

<pallas_src>
import math
import functools

import jax
import jax.numpy as jnp
from jax import lax
from jax.experimental import pallas as pl
from jax.experimental.pallas import tpu as pltpu

# ---- small but lane-aligned "LlamaConfig"-consistent sizes ------------------
HIDDEN = 256
NUM_HEADS = 2
NUM_KV_HEADS = 1
HEAD_DIM = HIDDEN // NUM_HEADS           # 128 (real Llama head_dim; full-lane slices)
NUM_KV_GROUPS = NUM_HEADS // NUM_KV_HEADS
ROPE_THETA = 10000.0
BATCH = 2
SEQ = 128
Q_TILE = 64                              # grid = (BATCH, SEQ // Q_TILE) = (2, 2)

Q_OUT = NUM_HEADS * HEAD_DIM             # 256
KV_OUT = NUM_KV_HEADS * HEAD_DIM         # 128
QKV_OUT = Q_OUT + 2 * KV_OUT             # 512
MASK_VALUE = -1e30                       # large negative; causal mask never fully masks a row
# TODO(synk): if padding/document masks are added later, guard fully-masked rows (0/0).


# ---------------- fused Pallas kernel ----------------------------------------

def _fused_llama_attention_kernel(
    x_ref, wqkv_ref, wo_ref, cos_ref, sin_ref, o_ref, *,
    num_heads, num_kv_heads, head_dim, q_tile, dot_dtype,
):
    seq = x_ref.shape[0]
    groups = num_heads // num_kv_heads
    q_out = num_heads * head_dim
    kv_out = num_kv_heads * head_dim
    half = head_dim // 2

    qt = pl.program_id(1)
    row0 = pl.multiple_of(qt * q_tile, q_tile)

    # K/V projection over the full sequence (every q tile needs all earlier keys under
    # causal attention); Q projection only for this q tile's rows.
    # TODO(synk): in production compute K/V once (separate kernel / KV cache) instead of
    # per q tile, and tile the kv axis (flash attention).
    x_full = x_ref[...]                                    # (S, HIDDEN) f32
    x_q = x_ref[pl.ds(row0, q_tile), :]                    # (TQ, HIDDEN)

    wq = wqkv_ref[:, :q_out]                               # softmax scale pre-folded here
    wkv = wqkv_ref[:, q_out:]

    q = jnp.dot(x_q.astype(dot_dtype), wq.astype(dot_dtype),
                preferred_element_type=jnp.float32)        # (TQ, Q_OUT)
    kv = jnp.dot(x_full.astype(dot_dtype), wkv.astype(dot_dtype),
                 preferred_element_type=jnp.float32)       # (S, 2*KV_OUT)

    # RoPE: sin_ref is pre-signed (concat(-sin_half, sin_half)), so
    #   rotate_half(x) * sin == pltpu.roll(x, D/2, axis=-1) * sin_signed
    # -> a single XLU lane rotate, no negate / lane-concat on the VALU path.
    cos_k = cos_ref[...]                                   # (S, D)
    sin_k = sin_ref[...]
    cos_q = cos_ref[pl.ds(row0, q_tile), :]                # (TQ, D)
    sin_q = sin_ref[pl.ds(row0, q_tile), :]

    k_heads, v_heads = [], []
    for kh in range(num_kv_heads):
        kk = kv[:, kh * head_dim:(kh + 1) * head_dim]
        k_heads.append(kk * cos_k + pltpu.roll(kk, shift=half, axis=1) * sin_k)
        v_heads.append(kv[:, kv_out + kh * head_dim: kv_out + (kh + 1) * head_dim])

    # Causal mask for this q tile (global q row = row0 + local row).
    qi = lax.broadcasted_iota(jnp.int32, (q_tile, seq), 0) + row0
    ki = lax.broadcasted_iota(jnp.int32, (q_tile, seq), 1)
    causal = ki <= qi

    # Per-head o_proj accumulation: no (TQ, H*D) concatenate, per-head tiles die right away.
    acc = jnp.zeros((q_tile, wo_ref.shape[1]), jnp.float32)
    # TODO(synk): at production num_heads (e.g. 32) replace this Python unroll with
    # lax.fori_loop accumulating into VMEM scratch (or a kv-head grid axis) to bound
    # vreg live ranges and code size.
    for h in range(num_heads):
        qh = q[:, h * head_dim:(h + 1) * head_dim]
        qh = qh * cos_q + pltpu.roll(qh, shift=half, axis=1) * sin_q   # scale already folded
        kh = k_heads[h // groups]                                      # GQA: shared kv head
        vh = v_heads[h // groups]

        s = lax.dot_general(qh.astype(dot_dtype), kh.astype(dot_dtype),
                            (((1,), (1,)), ((), ())),
                            preferred_element_type=jnp.float32)        # (TQ, S) = q @ k^T
        # TODO(synk): once the kv axis is tiled (flash), skip fully-masked kv tiles with
        # pl.when instead of masking after the matmul.
        s = jnp.where(causal, s, MASK_VALUE)
        s = s - jnp.max(s, axis=-1, keepdims=True)                     # softmax kept in f32
        p = jnp.exp(s)
        denom = jnp.sum(p, axis=-1, keepdims=True)
        p = p * pl.reciprocal(denom, approx=True)                      # EUP slot; ~2^-12 rel err

        out_h = jnp.dot(p.astype(dot_dtype), vh.astype(dot_dtype),
                        preferred_element_type=jnp.float32)            # (TQ, D)
        wo_h = wo_ref[h * head_dim:(h + 1) * head_dim, :]              # cheap sublane slice
        acc = acc + jnp.dot(out_h.astype(dot_dtype), wo_h.astype(dot_dtype),
                            preferred_element_type=jnp.float32)        # (TQ, HIDDEN)

    o_ref[...] = acc.astype(o_ref.dtype)


# ---------------- weight / table prep (once, outside the forward) ------------

def prepare_weights(params, head_dim):
    """nn.Linear weights are (out_features, in_features). Concatenate q/k/v rows,
    pre-fold the 1/sqrt(head_dim) softmax scale into the q rows (RoPE is linear, so
    scaling q before RoPE == scaling the scores), and pre-transpose ONCE so the kernel
    sees (K, N) operands with no per-call .T."""
    scale = 1.0 / math.sqrt(head_dim)
    wqkv_t = jnp.concatenate(
        [params["wq"] * scale, params["wk"], params["wv"]], axis=0).T   # (HIDDEN, QKV_OUT)
    wo_t = params["wo"].T                                               # (Q_OUT, HIDDEN)
    return wqkv_t, wo_t


def rope_tables(seq_len, dim, theta, dtype=jnp.float32):
    inv_freq = 1.0 / (theta ** (jnp.arange(0, dim, 2, dtype=jnp.float32) / dim))
    pos = jnp.arange(seq_len, dtype=jnp.float32)
    freqs = jnp.outer(pos, inv_freq)                     # (S, D/2)
    emb = jnp.concatenate([freqs, freqs], axis=-1)       # (S, D)
    cos = jnp.cos(emb)
    sin = jnp.sin(emb)
    # Pre-signed sin so rotate_half(x)*sin == roll(x, D/2)*sin_signed inside the kernel.
    sin_signed = jnp.concatenate([-jnp.sin(freqs), jnp.sin(freqs)], axis=-1)
    return cos.astype(dtype), sin.astype(dtype), sin_signed.astype(dtype)


# ---------------- forward -----------------------------------------------------

@functools.partial(jax.jit, static_argnames=("dot_dtype",))
def llama_attention_forward(x, wqkv_t, wo_t, cos, sin_signed, dot_dtype=jnp.float32):
    """x: (B, S, hidden) -> (B, S, hidden); single fused pallas_call.
    grid = (B, S // Q_TILE), both 'parallel' (parallel extent >= 2 even at B=1)."""
    B, S, hidden = x.shape
    num_q_tiles = S // Q_TILE
    kernel = functools.partial(
        _fused_llama_attention_kernel,
        num_heads=NUM_HEADS, num_kv_heads=NUM_KV_HEADS, head_dim=HEAD_DIM,
        q_tile=Q_TILE, dot_dtype=dot_dtype,
    )
    return pl.pallas_call(
        kernel,
        out_shape=jax.ShapeDtypeStruct((B, S, hidden), x.dtype),
        grid=(B, num_q_tiles),
        in_specs=[
            pl.BlockSpec((None, S, hidden), lambda b, qt: (b, 0, 0)),   # x (full seq; block reused across qt)
            pl.BlockSpec((hidden, QKV_OUT), lambda b, qt: (0, 0)),      # fused qkv weight (VMEM-resident)
            pl.BlockSpec((Q_OUT, hidden), lambda b, qt: (0, 0)),        # o_proj weight (VMEM-resident)
            pl.BlockSpec((S, HEAD_DIM), lambda b, qt: (0, 0)),          # cos
            pl.BlockSpec((S, HEAD_DIM), lambda b, qt: (0, 0)),          # pre-signed sin
        ],
        out_specs=pl.BlockSpec((None, Q_TILE, hidden), lambda b, qt: (b, qt, 0)),  # lane-dense store
        compiler_params=pltpu.CompilerParams(
            dimension_semantics=("parallel", "parallel"),
        ),
    )(x, wqkv_t, wo_t, cos, sin_signed)


# ---------------- pure-JAX reference (for correctness check) -----------------

def _rotate_half_ref(x):
    d = x.shape[-1] // 2
    return jnp.concatenate([-x[..., d:], x[..., :d]], axis=-1)


def reference_forward(x, params):
    B, S, _ = x.shape
    q = x @ params["wq"].T
    k = x @ params["wk"].T
    v = x @ params["wv"].T
    q = q.reshape(B, S, NUM_HEADS, HEAD_DIM).transpose(0, 2, 1, 3)
    k = k.reshape(B, S, NUM_KV_HEADS, HEAD_DIM).transpose(0, 2, 1, 3)
    v = v.reshape(B, S, NUM_KV_HEADS, HEAD_DIM).transpose(0, 2, 1, 3)
    cos, sin, _ = rope_tables(S, HEAD_DIM, ROPE_THETA, dtype=x.dtype)
    cos4, sin4 = cos[None, None], sin[None, None]
    q = q * cos4 + _rotate_half_ref(q) * sin4
    k = k * cos4 + _rotate_half_ref(k) * sin4
    k = jnp.repeat(k, NUM_KV_GROUPS, axis=1)   # repeat_kv (GQA)
    v = jnp.repeat(v, NUM_KV_GROUPS, axis=1)
    s = jnp.einsum("bhqd,bhkd->bhqk", q, k) / math.sqrt(HEAD_DIM)
    mask = jnp.tril(jnp.ones((S, S), dtype=bool))
    s = jnp.where(mask[None, None], s, jnp.finfo(jnp.float32).min)
    p = jax.nn.softmax(s.astype(jnp.float32), axis=-1).astype(x.dtype)
    o = jnp.einsum("bhqk,bhkd->bhqd", p, v)
    o = o.transpose(0, 2, 1, 3).reshape(B, S, NUM_HEADS * HEAD_DIM)
    return o @ params["wo"].T


# ---------------- main --------------------------------------------------------

if __name__ == "__main__":
    key = jax.random.PRNGKey(0)
    k_x, k_q, k_k, k_v, k_o = jax.random.split(key, 5)

    # nn.Linear weights are (out_features, in_features); attention_bias=False.
    params = {
        "wq": 0.05 * jax.random.normal(k_q, (NUM_HEADS * HEAD_DIM, HIDDEN), jnp.float32),
        "wk": 0.05 * jax.random.normal(k_k, (NUM_KV_HEADS * HEAD_DIM, HIDDEN), jnp.float32),
        "wv": 0.05 * jax.random.normal(k_v, (NUM_KV_HEADS * HEAD_DIM, HIDDEN), jnp.float32),
        "wo": 0.05 * jax.random.normal(k_o, (HIDDEN, NUM_HEADS * HEAD_DIM), jnp.float32),
    }
    x = jax.random.normal(k_x, (BATCH, SEQ, HIDDEN), jnp.float32)

    # Weight concat/transpose/scale-fold and RoPE tables prepared ONCE, outside the forward.
    wqkv_t, wo_t = prepare_weights(params, HEAD_DIM)
    cos, sin, sin_signed = rope_tables(SEQ, HEAD_DIM, ROPE_THETA, dtype=x.dtype)

    ref = jax.block_until_ready(reference_forward(x, params))

    # f32 MXU operands: strict parity check against the f32 reference.
    out = jax.block_until_ready(
        llama_attention_forward(x, wqkv_t, wo_t, cos, sin_signed, dot_dtype=jnp.float32))
    assert out.shape == (BATCH, SEQ, HIDDEN)
    # Slightly loose tolerance: in-kernel softmax uses the approximate EUP reciprocal.
    assert jnp.allclose(out, ref, atol=2e-2, rtol=2e-2), "f32 mismatch vs reference"

    # bf16 MXU operands (production path): f32 accumulation, f32 RoPE/softmax.
    out_bf16 = jax.block_until_ready(
        llama_attention_forward(x, wqkv_t, wo_t, cos, sin_signed, dot_dtype=jnp.bfloat16))
    assert jnp.allclose(out_bf16, ref, atol=5e-2, rtol=5e-2), "bf16 mismatch vs reference"

    print("KERNEL_OK")
</pallas_src>

<mosaic_0001>
module attributes {stable_mosaic.version = 11 : i64} {
  func.func @_fused_llama_attention_kernel(%arg0: i32, %arg1: i32, %arg2: memref<1x128x256xf32, #tpu.memory_space<vmem>>, %arg3: memref<256x512xf32, #tpu.memory_space<vmem>>, %arg4: memref<256x256xf32, #tpu.memory_space<vmem>>, %arg5: memref<128x128xf32, #tpu.memory_space<vmem>>, %arg6: memref<128x128xf32, #tpu.memory_space<vmem>>, %arg7: memref<1x64x256xf32, #tpu.memory_space<vmem>>) attributes {dimension_semantics = [#tpu.dimension_semantics<parallel>, #tpu.dimension_semantics<parallel>], iteration_bounds = array<i64: 2, 2>, scalar_prefetch = 0 : i64, scratch_operands = 0 : i64, tpu.core_type = #tpu.core_type<tc>, window_params = [{transform_indices = @transform_0, window_bounds = array<i64: 1, 128, 256>}, {pipeline_mode = #tpu.pipeline_mode<synchronous>, transform_indices = @transform_1, window_bounds = array<i64: 256, 512>}, {pipeline_mode = #tpu.pipeline_mode<synchronous>, transform_indices = @transform_2, window_bounds = array<i64: 256, 256>}, {pipeline_mode = #tpu.pipeline_mode<synchronous>, transform_indices = @transform_3, window_bounds = array<i64: 128, 128>}, {pipeline_mode = #tpu.pipeline_mode<synchronous>, transform_indices = @transform_4, window_bounds = array<i64: 128, 128>}, {transform_indices = @transform_5, window_bounds = array<i64: 1, 64, 256>}]} {
    %c64_i32 = arith.constant 64 : i32
    %0 = arith.muli %arg1, %c64_i32 : i32
    %1 = tpu.assume_multiple %0, 64 : i32
    %c0 = arith.constant 0 : index
    %c0_0 = arith.constant 0 : index
    %c0_1 = arith.constant 0 : index
    %2 = vector.load %arg2[%c0, %c0_0, %c0_1] : memref<1x128x256xf32, #tpu.memory_space<vmem>>, vector<1x128x256xf32>
    %3 = vector.shape_cast %2 : vector<1x128x256xf32> to vector<128x256xf32>
    %c0_2 = arith.constant 0 : index
    %4 = arith.index_cast %1 : i32 to index
    %c0_3 = arith.constant 0 : index
    %5 = vector.load %arg2[%c0_2, %4, %c0_3] : memref<1x128x256xf32, #tpu.memory_space<vmem>>, vector<1x64x256xf32>
    %6 = vector.shape_cast %5 : vector<1x64x256xf32> to vector<64x256xf32>
    %c0_4 = arith.constant 0 : index
    %c0_5 = arith.constant 0 : index
    %7 = vector.load %arg3[%c0_4, %c0_5] : memref<256x512xf32, #tpu.memory_space<vmem>>, vector<256x256xf32>
    %c0_6 = arith.constant 0 : index
    %c256 = arith.constant 256 : index
    %8 = vector.load %arg3[%c0_6, %c256] : memref<256x512xf32, #tpu.memory_space<vmem>>, vector<256x256xf32>
    %cst = arith.constant dense<0.000000e+00> : vector<64x256xf32>
    %9 = tpu.matmul %6, %7, %cst {dimension_numbers = #tpu.dot_dimension_numbers<[1], [0], [0], [1], [0, 0, 1, 1], [], []>} : vector<64x256xf32>, vector<256x256xf32>, vector<64x256xf32> -> vector<64x256xf32>
    %cst_7 = arith.constant dense<0.000000e+00> : vector<128x256xf32>
    %10 = tpu.matmul %3, %8, %cst_7 {dimension_numbers = #tpu.dot_dimension_numbers<[1], [0], [0], [1], [0, 0, 1, 1], [], []>} : vector<128x256xf32>, vector<256x256xf32>, vector<128x256xf32> -> vector<128x256xf32>
    %c0_8 = arith.constant 0 : index
    %c0_9 = arith.constant 0 : index
    %11 = vector.load %arg5[%c0_8, %c0_9] : memref<128x128xf32, #tpu.memory_space<vmem>>, vector<128x128xf32>
    %c0_10 = arith.constant 0 : index
    %c0_11 = arith.constant 0 : index
    %12 = vector.load %arg6[%c0_10, %c0_11] : memref<128x128xf32, #tpu.memory_space<vmem>>, vector<128x128xf32>
    %13 = arith.index_cast %1 : i32 to index
    %c0_12 = arith.constant 0 : index
    %14 = vector.load %arg5[%13, %c0_12] : memref<128x128xf32, #tpu.memory_space<vmem>>, vector<64x128xf32>
    %15 = arith.index_cast %1 : i32 to index
    %c0_13 = arith.constant 0 : index
    %16 = vector.load %arg6[%15, %c0_13] : memref<128x128xf32, #tpu.memory_space<vmem>>, vector<64x128xf32>
    %17 = vector.extract_strided_slice %10 {offsets = [0, 0], sizes = [128, 128], strides = [1, 1]} : vector<128x256xf32> to vector<128x128xf32>
    %18 = arith.mulf %17, %11 : vector<128x128xf32>
    %c64_i32_14 = arith.constant 64 : i32
    %19 = tpu.dynamic_rotate %17 by %c64_i32_14 dim 1 : vector<128x128xf32>, i32 -> vector<128x128xf32>
    %20 = arith.mulf %19, %12 : vector<128x128xf32>
    %21 = arith.addf %18, %20 : vector<128x128xf32>
    %22 = vector.extract_strided_slice %10 {offsets = [0, 128], sizes = [128, 128], strides = [1, 1]} : vector<128x256xf32> to vector<128x128xf32>
    %23 = tpu.iota {dimensions = array<i32: 0>} : vector<64x128xi32>
    %24 = vector.broadcast %1 : i32 to vector<64x128xi32>
    %25 = arith.addi %23, %24 : vector<64x128xi32>
    %26 = tpu.iota {dimensions = array<i32: 1>} : vector<64x128xi32>
    %27 = arith.cmpi sle, %26, %25 : vector<64x128xi32>
    %cst_15 = arith.constant 0.000000e+00 : f32
    %28 = vector.broadcast %cst_15 : f32 to vector<64x256xf32>
    %29 = vector.extract_strided_slice %9 {offsets = [0, 0], sizes = [64, 128], strides = [1, 1]} : vector<64x256xf32> to vector<64x128xf32>
    %30 = arith.mulf %29, %14 : vector<64x128xf32>
    %c64_i32_16 = arith.constant 64 : i32
    %31 = tpu.dynamic_rotate %29 by %c64_i32_16 dim 1 : vector<64x128xf32>, i32 -> vector<64x128xf32>
    %32 = arith.mulf %31, %16 : vector<64x128xf32>
    %33 = arith.addf %30, %32 : vector<64x128xf32>
    %cst_17 = arith.constant dense<0.000000e+00> : vector<64x128xf32>
    %34 = tpu.matmul %33, %21, %cst_17 {dimension_numbers = #tpu.dot_dimension_numbers<[1], [1], [0], [0], [0, 0, 1, 0], [], []>} : vector<64x128xf32>, vector<128x128xf32>, vector<64x128xf32> -> vector<64x128xf32>
    %cst_18 = arith.constant -1.000000e+30 : f32
    %35 = vector.broadcast %cst_18 : f32 to vector<64x128xf32>
    %36 = arith.select %27, %34, %35 : vector<64x128xi1>, vector<64x128xf32>
    %cst_19 = arith.constant dense<0xFF800000> : vector<64xf32>
    %37 = vector.multi_reduction <maximumf>, %36, %cst_19 [1] : vector<64x128xf32> to vector<64xf32>
    %38 = vector.shape_cast %37 : vector<64xf32> to vector<64x1xf32>
    %39 = vector.broadcast %38 : vector<64x1xf32> to vector<64x128xf32>
    %40 = arith.subf %36, %39 : vector<64x128xf32>
    %41 = math.exp %40 : vector<64x128xf32>
    %cst_20 = arith.constant dense<0.000000e+00> : vector<64xf32>
    %42 = vector.multi_reduction <add>, %41, %cst_20 [1] : vector<64x128xf32> to vector<64xf32>
    %43 = vector.shape_cast %42 : vector<64xf32> to vector<64x1xf32>
    %44 = tpu.reciprocal %43 {approx = true} : vector<64x1xf32> -> vector<64x1xf32>
    %45 = vector.broadcast %44 : vector<64x1xf32> to vector<64x128xf32>
    %46 = arith.mulf %41, %45 : vector<64x128xf32>
    %cst_21 = arith.constant dense<0.000000e+00> : vector<64x128xf32>
    %47 = tpu.matmul %46, %22, %cst_21 {dimension_numbers = #tpu.dot_dimension_numbers<[1], [0], [0], [1], [0, 0, 1, 1], [], []>} : vector<64x128xf32>, vector<128x128xf32>, vector<64x128xf32> -> vector<64x128xf32>
    %c0_22 = arith.constant 0 : index
    %c0_23 = arith.constant 0 : index
    %48 = vector.load %arg4[%c0_22, %c0_23] : memref<256x256xf32, #tpu.memory_space<vmem>>, vector<128x256xf32>
    %cst_24 = arith.constant dense<0.000000e+00> : vector<64x256xf32>
    %49 = tpu.matmul %47, %48, %cst_24 {dimension_numbers = #tpu.dot_dimension_numbers<[1], [0], [0], [1], [0, 0, 1, 1], [], []>} : vector<64x128xf32>, vector<128x256xf32>, vector<64x256xf32> -> vector<64x256xf32>
    %50 = arith.addf %28, %49 : vector<64x256xf32>
    %51 = vector.extract_strided_slice %9 {offsets = [0, 128], sizes = [64, 128], strides = [1, 1]} : vector<64x256xf32> to vector<64x128xf32>
    %52 = arith.mulf %51, %14 : vector<64x128xf32>
    %c64_i32_25 = arith.constant 64 : i32
    %53 = tpu.dynamic_rotate %51 by %c64_i32_25 dim 1 : vector<64x128xf32>, i32 -> vector<64x128xf32>
    %54 = arith.mulf %53, %16 : vector<64x128xf32>
    %55 = arith.addf %52, %54 : vector<64x128xf32>
    %cst_26 = arith.constant dense<0.000000e+00> : vector<64x128xf32>
    %56 = tpu.matmul %55, %21, %cst_26 {dimension_numbers = #tpu.dot_dimension_numbers<[1], [1], [0], [0], [0, 0, 1, 0], [], []>} : vector<64x128xf32>, vector<128x128xf32>, vector<64x128xf32> -> vector<64x128xf32>
    %cst_27 = arith.constant -1.000000e+30 : f32
    %57 = vector.broadcast %cst_27 : f32 to vector<64x128xf32>
    %58 = arith.select %27, %56, %57 : vector<64x128xi1>, vector<64x128xf32>
    %cst_28 = arith.constant dense<0xFF800000> : vector<64xf32>
    %59 = vector.multi_reduction <maximumf>, %58, %cst_28 [1] : vector<64x128xf32> to vector<64xf32>
    %60 = vector.shape_cast %59 : vector<64xf32> to vector<64x1xf32>
    %61 = vector.broadcast %60 : vector<64x1xf32> to vector<64x128xf32>
    %62 = arith.subf %58, %61 : vector<64x128xf32>
    %63 = math.exp %62 : vector<64x128xf32>
    %cst_29 = arith.constant dense<0.000000e+00> : vector<64xf32>
    %64 = vector.multi_reduction <add>, %63, %cst_29 [1] : vector<64x128xf32> to vector<64xf32>
    %65 = vector.shape_cast %64 : vector<64xf32> to vector<64x1xf32>
    %66 = tpu.reciprocal %65 {approx = true} : vector<64x1xf32> -> vector<64x1xf32>
    %67 = vector.broadcast %66 : vector<64x1xf32> to vector<64x128xf32>
    %68 = arith.mulf %63, %67 : vector<64x128xf32>
    %cst_30 = arith.constant dense<0.000000e+00> : vector<64x128xf32>
    %69 = tpu.matmul %68, %22, %cst_30 {dimension_numbers = #tpu.dot_dimension_numbers<[1], [0], [0], [1], [0, 0, 1, 1], [], []>} : vector<64x128xf32>, vector<128x128xf32>, vector<64x128xf32> -> vector<64x128xf32>
    %c128 = arith.constant 128 : index
    %c0_31 = arith.constant 0 : index
    %70 = vector.load %arg4[%c128, %c0_31] : memref<256x256xf32, #tpu.memory_space<vmem>>, vector<128x256xf32>
    %cst_32 = arith.constant dense<0.000000e+00> : vector<64x256xf32>
    %71 = tpu.matmul %69, %70, %cst_32 {dimension_numbers = #tpu.dot_dimension_numbers<[1], [0], [0], [1], [0, 0, 1, 1], [], []>} : vector<64x128xf32>, vector<128x256xf32>, vector<64x256xf32> -> vector<64x256xf32>
    %72 = arith.addf %50, %71 : vector<64x256xf32>
    %c0_33 = arith.constant 0 : index
    %c0_34 = arith.constant 0 : index
    %c0_35 = arith.constant 0 : index
    %73 = vector.load %arg7[%c0_33, %c0_34, %c0_35] : memref<1x64x256xf32, #tpu.memory_space<vmem>>, vector<1x64x256xf32>
    %74 = vector.shape_cast %73 : vector<1x64x256xf32> to vector<64x256xf32>
    %75 = vector.shape_cast %72 : vector<64x256xf32> to vector<1x64x256xf32>
    tpu.vector_store %arg7[%c0_33, %c0_34, %c0_35], %75 {strides = array<i32>} : memref<1x64x256xf32, #tpu.memory_space<vmem>>, vector<1x64x256xf32>,
    return
  }
  func.func @transform_0(%arg0: i32, %arg1: i32) -> (i32, i32, i32) {
    %c0_i32 = arith.constant 0 : i32
    %c0_i32_0 = arith.constant 0 : i32
    %c0_i32_1 = arith.constant 0 : i32
    return %arg0, %c0_i32, %c0_i32_0 : i32, i32, i32
  }
  func.func @transform_1(%arg0: i32, %arg1: i32) -> (i32, i32) {
    %c0_i32 = arith.constant 0 : i32
    %c0_i32_0 = arith.constant 0 : i32
    %c0_i32_1 = arith.constant 0 : i32
    return %c0_i32, %c0_i32_0 : i32, i32
  }
  func.func @transform_2(%arg0: i32, %arg1: i32) -> (i32, i32) {
    %c0_i32 = arith.constant 0 : i32
    %c0_i32_0 = arith.constant 0 : i32
    %c0_i32_1 = arith.constant 0 : i32
    return %c0_i32, %c0_i32_0 : i32, i32
  }
  func.func @transform_3(%arg0: i32, %arg1: i32) -> (i32, i32) {
    %c0_i32 = arith.constant 0 : i32
    %c0_i32_0 = arith.constant 0 : i32
    %c0_i32_1 = arith.constant 0 : i32
    return %c0_i32, %c0_i32_0 : i32, i32
  }
  func.func @transform_4(%arg0: i32, %arg1: i32) -> (i32, i32) {
    %c0_i32 = arith.constant 0 : i32
    %c0_i32_0 = arith.constant 0 : i32
    %c0_i32_1 = arith.constant 0 : i32
    return %c0_i32, %c0_i32_0 : i32, i32
  }
  func.func @transform_5(%arg0: i32, %arg1: i32) -> (i32, i32, i32) {
    %c0_i32 = arith.constant 0 : i32
    %c0_i32_0 = arith.constant 0 : i32
    return %arg0, %arg1, %c0_i32 : i32, i32, i32
  }
}

</mosaic_0001>

<llo_original>
// kernel: llama_attention_forward.1
$region0: #{llama_attention_forward.1}
  #allocation0 [shape = 'u32[]', space=smem, size = 0x4, offset = 0x4, fixed_abs, tag = 'smem constant byte address 0x4 - core index']
  #allocation1 [shape = 'u32[144,128]{1,0:T(1,128)}', space=vmem, size = 0x12000, scoped, tag = 'internal scratch']
  %s0 = inlined_call_operand.hbm [shape: f32[2,128,256], index: 0, kind: input, shape index: {}]
  %s1 = inlined_call_operand.hbm [shape: f32[256,512], index: 1, kind: input, shape index: {}]
  %s2 = inlined_call_operand.hbm [shape: f32[256,256], index: 2, kind: input, shape index: {}]
  %s3 = inlined_call_operand.hbm [shape: f32[128,128], index: 3, kind: input, shape index: {}]
  %s4 = inlined_call_operand.hbm [shape: f32[128,128], index: 4, kind: input, shape index: {}]
  %s5 = inlined_call_operand.hbm [shape: f32[2,128,256], index: 5, kind: output, shape index: {}]
  %s6 = sld [smem:[#allocation0]]
  $region73: #{llama_attention_forward.1} parent=0
    _
  %s8 = ssub.s32 1, %s6
  %s9 = scalar_select 0, %s8, %s6
  $region1: #{llama_attention_forward.1} parent=0
    #allocation2 [shape = 'u8[262144]{0}', space=vmem, size = 0x40000, scoped, tag = 'input window, operand 0']
    #allocation3 [shape = 's32[2]{0}', space=sflag, size = 0x8, scoped, tag = 'scoped memory for llama_attention_forward.1']
    #allocation4 [shape = 's32[2]{0}', space=sflag, size = 0x8, scoped, tag = 'scoped memory for llama_attention_forward.1']
    #allocation5 [shape = 'u8[524288]{0}', space=vmem, size = 0x80000, scoped, tag = 'input window, operand 1, single buffered']
    #allocation6 [shape = 's32[1]{0}', space=sflag, size = 0x4, scoped, tag = 'scoped memory for llama_attention_forward.1']
    #allocation7 [shape = 'u8[262144]{0}', space=vmem, size = 0x40000, scoped, tag = 'input window, operand 2, single buffered']
    #allocation8 [shape = 'u8[65536]{0}', space=vmem, size = 0x10000, scoped, tag = 'input window, operand 3, single buffered']
    #allocation9 [shape = 's32[1]{0}', space=sflag, size = 0x4, scoped, tag = 'scoped memory for llama_attention_forward.1']
    #allocation10 [shape = 'u8[65536]{0}', space=vmem, size = 0x10000, scoped, tag = 'input window, operand 4, single buffered']
    #allocation11 [shape = 'u8[131072]{0}', space=vmem, size = 0x20000, scoped, tag = 'output window, operand 0']
    %10 = vsyncpa [#allocation3], 0
    %s11 = scalar_lea.sflag [#allocation3], 1
    %12 = vsyncpa %s11, 0
    %13 = vsyncpa [#allocation6], 0
    %14 = vsyncpa [#allocation9], 0
    %15 = vsyncpa [#allocation4], 0
    %s16 = scalar_lea.sflag [#allocation4], 1
    %17 = vsyncpa %s16, 0
    loop: start=0, step=1, limit=6
    $region2: #{llama_attention_forward.1} parent=1 // loop_pre_header
      _
    $region3: #{llama_attention_forward.1} parent=1 // loop_header
      %s19 = sphi 0, %s23
      %p20 = scmp.ge.s32.totalorder %s19, 6
      %s26 = sphi 0, %s38
      %s27 = sphi 0, %s34
      %s28 = sphi 0, %s26
      %s29 = sphi 0, %s27
      %s30 = sphi 0, %s28
      %s31 = sphi 0, %s29
      %s41 = sphi 0, %s43
      %s44 = sphi 0, %s41
      %s45 = sphi 0, %s44
      %s61 = sphi 0, %s45
      %s65 = sphi 0, %s65
      %s67 = sphi 0, %s65
      %s68 = sphi 0, %s67
      %s82 = sphi 0, %s68
      %s86 = sphi 0, %s86
      %s88 = sphi 0, %s86
      %s89 = sphi 0, %s88
      %s103 = sphi 0, %s89
      %s107 = sphi 0, %s107
      %s109 = sphi 0, %s107
      %s110 = sphi 0, %s109
      %s124 = sphi 0, %s110
      %s128 = sphi 0, %s128
      %s130 = sphi 0, %s128
      %s131 = sphi 0, %s130
      %s145 = sphi 0, %s131
      %s153 = sphi 0, %s155
      %s156 = sphi 0, %s153
      %s157 = sphi 0, %s156
      %s173 = sphi 0, %s157
    $region4: #{llama_attention_forward.1} parent=1 // loop_header_branch
      %22 = sbr.rel (%p20) target = $region8
    $region5: #{llama_attention_forward.1} parent=1 // loop_body
      %s24 = ssub.s32 %s19, 1
      %s25 = ssub.s32 %s19, 2
      %s32 = sadd.s32 1, %s27
      %p33 = scmp.ge.s32.totalorder %s32, 2
      %s34 = scalar_select %p33, 0, %s32
      %s35 = sadd.s32 1, %s26
      %s36 = scalar_select %p33, %s35, %s26
      %p37 = scmp.ge.s32.totalorder %s36, 2
      %s38 = scalar_select %p37, 0, %s36
      %s39 = ssub.s32 %s26, %s38
      %p40 = scmp.eq.s32.totalorder %s39, 0
      %s42 = sadd.s32 %s41, 1
      %s43 = scalar_select %p40, %s41, %s42
      %p46 = pneg %p40
      %p47 = scmp.eq.s32.totalorder %s19, 3
      %p48 = por %p46, %p47
      %p49 = scmp.ne.s32.totalorder %s41, %s44
      %p50 = scmp.eq.s32.totalorder %s19, 0
      %p51 = por %p49, %p50
      %p52 = scmp.ne.s32.totalorder %s41, %s44
      %p53 = scmp.eq.s32.totalorder %s24, 3
      %p54 = por %p52, %p53
      %p55 = scmp.ne.s32.totalorder %s44, %s45
      %p56 = scmp.eq.s32.totalorder %s24, 0
      %p57 = por %p55, %p56
      %p58 = scmp.ne.s32.totalorder %s44, %s45
      %p59 = scmp.eq.s32.totalorder %s25, 3
      %p60 = por %p58, %p59
      %p62 = scmp.ne.s32.totalorder %s45, %s61
      %p63 = scmp.eq.s32.totalorder %s25, 0
      %p64 = por %p62, %p63
      %s66 = sadd.s32 %s65, 1
      %p69 = scmp.eq.s32.totalorder %s19, 3
      %p70 = scmp.ne.s32.totalorder %s65, %s67
      %p71 = scmp.eq.s32.totalorder %s19, 0
      %p72 = por %p70, %p71
      %p73 = scmp.ne.s32.totalorder %s65, %s67
      %p74 = scmp.eq.s32.totalorder %s24, 3
      %p75 = por %p73, %p74
      %p76 = scmp.ne.s32.totalorder %s67, %s68
      %p77 = scmp.eq.s32.totalorder %s24, 0
      %p78 = por %p76, %p77
      %p79 = scmp.ne.s32.totalorder %s67, %s68
      %p80 = scmp.eq.s32.totalorder %s25, 3
      %p81 = por %p79, %p80
      %p83 = scmp.ne.s32.totalorder %s68, %s82
      %p84 = scmp.eq.s32.totalorder %s25, 0
      %p85 = por %p83, %p84
      %s87 = sadd.s32 %s86, 1
      %p90 = scmp.eq.s32.totalorder %s19, 3
      %p91 = scmp.ne.s32.totalorder %s86, %s88
      %p92 = scmp.eq.s32.totalorder %s19, 0
      %p93 = por %p91, %p92
      %p94 = scmp.ne.s32.totalorder %s86, %s88
      %p95 = scmp.eq.s32.totalorder %s24, 3
      %p96 = por %p94, %p95
      %p97 = scmp.ne.s32.totalorder %s88, %s89
      %p98 = scmp.eq.s32.totalorder %s24, 0
      %p99 = por %p97, %p98
      %p100 = scmp.ne.s32.totalorder %s88, %s89
      %p101 = scmp.eq.s32.totalorder %s25, 3
      %p102 = por %p100, %p101
      %p104 = scmp.ne.s32.totalorder %s89, %s103
      %p105 = scmp.eq.s32.totalorder %s25, 0
      %p106 = por %p104, %p105
      %s108 = sadd.s32 %s107, 1
      %p111 = scmp.eq.s32.totalorder %s19, 3
      %p112 = scmp.ne.s32.totalorder %s107, %s109
      %p113 = scmp.eq.s32.totalorder %s19, 0
      %p114 = por %p112, %p113
      %p115 = scmp.ne.s32.totalorder %s107, %s109
      %p116 = scmp.eq.s32.totalorder %s24, 3
      %p117 = por %p115, %p116
      %p118 = scmp.ne.s32.totalorder %s109, %s110
      %p119 = scmp.eq.s32.totalorder %s24, 0
      %p120 = por %p118, %p119
      %p121 = scmp.ne.s32.totalorder %s109, %s110
      %p122 = scmp.eq.s32.totalorder %s25, 3
      %p123 = por %p121, %p122
      %p125 = scmp.ne.s32.totalorder %s110, %s124
      %p126 = scmp.eq.s32.totalorder %s25, 0
      %p127 = por %p125, %p126
      %s129 = sadd.s32 %s128, 1
      %p132 = scmp.eq.s32.totalorder %s19, 3
      %p133 = scmp.ne.s32.totalorder %s128, %s130
      %p134 = scmp.eq.s32.totalorder %s19, 0
      %p135 = por %p133, %p134
      %p136 = scmp.ne.s32.totalorder %s128, %s130
      %p137 = scmp.eq.s32.totalorder %s24, 3
      %p138 = por %p136, %p137
      %p139 = scmp.ne.s32.totalorder %s130, %s131
      %p140 = scmp.eq.s32.totalorder %s24, 0
      %p141 = por %p139, %p140
      %p142 = scmp.ne.s32.totalorder %s130, %s131
      %p143 = scmp.eq.s32.totalorder %s25, 3
      %p144 = por %p142, %p143
      %p146 = scmp.ne.s32.totalorder %s131, %s145
      %p147 = scmp.eq.s32.totalorder %s25, 0
      %p148 = por %p146, %p147
      %s149 = ssub.s32 %s26, %s38
      %s150 = ssub.s32 %s27, %s34
      %s151 = sor.u32 %s149, %s150
      %p152 = scmp.eq.s32.totalorder %s151, 0
      %s154 = sadd.s32 %s153, 1
      %s155 = scalar_select %p152, %s153, %s154
      %p158 = pneg %p152
      %p159 = scmp.eq.s32.totalorder %s19, 3
      %p160 = por %p158, %p159
      %p161 = scmp.ne.s32.totalorder %s153, %s156
      %p162 = scmp.eq.s32.totalorder %s19, 0
      %p163 = por %p161, %p162
      %p164 = scmp.ne.s32.totalorder %s153, %s156
      %p165 = scmp.eq.s32.totalorder %s24, 3
      %p166 = por %p164, %p165
      %p167 = scmp.ne.s32.totalorder %s156, %s157
      %p168 = scmp.eq.s32.totalorder %s24, 0
      %p169 = por %p167, %p168
      %p170 = scmp.ne.s32.totalorder %s156, %s157
      %p171 = scmp.eq.s32.totalorder %s25, 3
      %p172 = por %p170, %p171
      %p174 = scmp.ne.s32.totalorder %s157, %s173
      %p175 = scmp.eq.s32.totalorder %s25, 0
      %p176 = por %p174, %p175
      %p177 = scmp.le.s32.totalorder 1, %s19
      %p178 = scmp.lt.s32.totalorder %s19, 5
      %p179 = pnand %p177, %p178
      %p180 = pneg %p179
      // Predicated region
      $region9: #{llama_attention_forward.1} parent=5 // pred_check
        _
      $region10: #{llama_attention_forward.1} parent=5 // pred_check_branch
        %182 = sbr.rel (%p179) target = $region12
      $region11: #{llama_attention_forward.1} parent=5 // pred_region
        %s183 = ssub.s32 %s19, 1
        // Predicated region
        $region13: #{llama_attention_forward.1} parent=11 // pred_check
          %p184 = pneg %p78
        $region14: #{llama_attention_forward.1} parent=11 // pred_check_branch
          %186 = sbr.rel (%p184) target = $region16
        $region15: #{llama_attention_forward.1} parent=11 // pred_region
          %s188 = ssub.s32 16384, 16384
          %189 = vsyncadd [#allocation6], %s188
          %s190 = sshll.u32 [#allocation5], 4
          %s191 = int_to_ptr.vmem [resolvable:$true] %s190
          %196 = dma.hbm_to_vmem [thread:$0]  %s1, 16384, %s191, [#allocation6], 512, 512, 32
        $region16: #{llama_attention_forward.1} parent=11 // pred_fallthru
          _
        // Predicated region
        $region17: #{llama_attention_forward.1} parent=11 // pred_check
          %p197 = pneg %p99
        $region18: #{llama_attention_forward.1} parent=11 // pred_check_branch
          %199 = sbr.rel (%p197) target = $region20
        $region19: #{llama_attention_forward.1} parent=11 // pred_region
          %s201 = ssub.s32 8192, 8192
          %202 = vsyncadd [#allocation6], %s201
          %s203 = sshll.u32 [#allocation7], 4
          %s204 = int_to_ptr.vmem [resolvable:$true] %s203
          %209 = dma.hbm_to_vmem [thread:$0]  %s2, 8192, %s204, [#allocation6], 256, 256, 16
        $region20: #{llama_attention_forward.1} parent=11 // pred_fallthru
          _
        // Predicated region
        $region21: #{llama_attention_forward.1} parent=11 // pred_check
          %p210 = pneg %p120
        $region22: #{llama_attention_forward.1} parent=11 // pred_check_branch
          %212 = sbr.rel (%p210) target = $region24
        $region23: #{llama_attention_forward.1} parent=11 // pred_region
          %s214 = ssub.s32 2048, 2048
          %215 = vsyncadd [#allocation9], %s214
          %s216 = sshll.u32 [#allocation8], 4
          %s217 = int_to_ptr.vmem [resolvable:$true] %s216
          %222 = dma.hbm_to_vmem [thread:$0]  %s3, 2048, %s217, [#allocation9], 128, 128, 8
        $region24: #{llama_attention_forward.1} parent=11 // pred_fallthru
          _
        // Predicated region
        $region25: #{llama_attention_forward.1} parent=11 // pred_check
          %p223 = pneg %p141
        $region26: #{llama_attention_forward.1} parent=11 // pred_check_branch
          %225 = sbr.rel (%p223) target = $region28
        $region27: #{llama_attention_forward.1} parent=11 // pred_region
          %s227 = ssub.s32 2048, 2048
          %228 = vsyncadd [#allocation9], %s227
          %s229 = sshll.u32 [#allocation10], 4
          %s230 = int_to_ptr.vmem [resolvable:$true] %s229
          %235 = dma.hbm_to_vmem [thread:$0]  %s4, 2048, %s230, [#allocation9], 128, 128, 8
        $region28: #{llama_attention_forward.1} parent=11 // pred_fallthru
          _
      $region12: #{llama_attention_forward.1} parent=5 // pred_fallthru
        _
      %p236 = scmp.lt.s32.totalorder %s19, 4
      // Predicated region
      $region29: #{llama_attention_forward.1} parent=5 // pred_check
        %p237 = pneg %p236
      $region30: #{llama_attention_forward.1} parent=5 // pred_check_branch
        %239 = sbr.rel (%p237) target = $region32
      $region31: #{llama_attention_forward.1} parent=5 // pred_region
        // Predicated region
        $region33: #{llama_attention_forward.1} parent=31 // pred_check
          %p240 = pneg %p51
        $region34: #{llama_attention_forward.1} parent=31 // pred_check_branch
          %242 = sbr.rel (%p240) target = $region36
        $region35: #{llama_attention_forward.1} parent=31 // pred_region
          %s243 = sand.u32 %s41, 1
          %s244 = scalar_lea.sflag [#allocation3], %s243
          %s245 = sand.u32 %s41, 1
          %s246 = smul.addr %s245, 256
          %s247 = scalar_lea.vmem [#allocation2], %s246
          %s249 = ssub.s32 4096, 4096
          %250 = vsyncadd %s244, %s249
          %s251 = smul.addr %s26, 32
          %s252 = smul.addr %s251, 128
          %s253 = scalar_lea.hbm %s0, %s252
          %s254 = sshll.u32 %s247, 4
          %s255 = int_to_ptr.vmem [resolvable:$true] %s254
          %260 = dma.hbm_to_vmem [thread:$0]  %s253, 4096, %s255, %s244, 256, 256, 16
        $region36: #{llama_attention_forward.1} parent=31 // pred_fallthru
          _
      $region32: #{llama_attention_forward.1} parent=5 // pred_fallthru
        _
      %p261 = scmp.le.s32.totalorder 1, %s19
      %p262 = scmp.lt.s32.totalorder %s19, 5
      %p263 = pnand %p261, %p262
      %p264 = pneg %p263
      // Predicated region
      $region37: #{llama_attention_forward.1} parent=5 // pred_check
        _
      $region38: #{llama_attention_forward.1} parent=5 // pred_check_branch
        %266 = sbr.rel (%p263) target = $region40
      $region39: #{llama_attention_forward.1} parent=5 // pred_region
        %s267 = ssub.s32 %s19, 1
        %s268 = sand.u32 %s44, 1
        %s269 = scalar_lea.sflag [#allocation3], %s268
        %s270 = sand.u32 %s44, 1
        %s271 = smul.addr %s270, 256
        %s272 = scalar_lea.vmem [#allocation2], %s271
        // Predicated region
        $region41: #{llama_attention_forward.1} parent=39 // pred_check
          %p273 = pneg %p57
        $region42: #{llama_attention_forward.1} parent=39 // pred_check_branch
          %275 = sbr.rel (%p273) target = $region44
        $region43: #{llama_attention_forward.1} parent=39 // pred_region
          %276 = dma.done %s269, 4096
        $region44: #{llama_attention_forward.1} parent=39 // pred_fallthru
          _
        // Predicated region
        $region45: #{llama_attention_forward.1} parent=39 // pred_check
          %p277 = pneg %p78
        $region46: #{llama_attention_forward.1} parent=39 // pred_check_branch
          %279 = sbr.rel (%p277) target = $region48
        $region47: #{llama_attention_forward.1} parent=39 // pred_region
          %280 = dma.done [#allocation6], 16384
        $region48: #{llama_attention_forward.1} parent=39 // pred_fallthru
          _
        // Predicated region
        $region49: #{llama_attention_forward.1} parent=39 // pred_check
          %p281 = pneg %p99
        $region50: #{llama_attention_forward.1} parent=39 // pred_check_branch
          %283 = sbr.rel (%p281) target = $region52
        $region51: #{llama_attention_forward.1} parent=39 // pred_region
          %284 = dma.done [#allocation6], 8192
        $region52: #{llama_attention_forward.1} parent=39 // pred_fallthru
          _
        // Predicated region
        $region53: #{llama_attention_forward.1} parent=39 // pred_check
          %p285 = pneg %p120
        $region54: #{llama_attention_forward.1} parent=39 // pred_check_branch
          %287 = sbr.rel (%p285) target = $region56
        $region55: #{llama_attention_forward.1} parent=39 // pred_region
          %288 = dma.done [#allocation9], 2048
        $region56: #{llama_attention_forward.1} parent=39 // pred_fallthru
          _
        // Predicated region
        $region57: #{llama_attention_forward.1} parent=39 // pred_check
          %p289 = pneg %p141
        $region58: #{llama_attention_forward.1} parent=39 // pred_check_branch
          %291 = sbr.rel (%p289) target = $region60
        $region59: #{llama_attention_forward.1} parent=39 // pred_region
          %292 = dma.done [#allocation9], 2048
        $region60: #{llama_attention_forward.1} parent=39 // pred_fallthru
          _
        %s293 = sand.u32 %s44, 1
        %s294 = scalar_lea.sflag [#allocation3], %s293
        %s295 = sand.u32 %s44, 1
        %s296 = smul.addr %s295, 256
        %s297 = scalar_lea.vmem [#allocation2], %s296
        %p298 = pneg %p57
        %p299 = pneg %p54
        %p300 = pneg %p78
        %p301 = pneg %p75
        %p302 = pneg %p99
        %p303 = pneg %p96
        %p304 = pneg %p120
        %p305 = pneg %p117
        %p306 = pneg %p141
        %p307 = pneg %p138
        %p308 = pneg %p169
        %p309 = pneg %p166
        %s310 = sand.u32 %s156, 1
        %s311 = scalar_lea.sflag [#allocation4], %s310
        %s312 = sand.u32 %s156, 1
        %s313 = smul.addr %s312, 128
        %s314 = scalar_lea.vmem [#allocation11], %s313
        %s315 = smul.u32 8, %s29
        %s316 = smul.u32 %s29, 64
        %v317 = vld [vmem:[%s272] sm:$0xff]
        %v318 = vld [vmem:[%s272 + $0x8] sm:$0xff]
        %v319 = vld [vmem:[%s272 + $0x10] sm:$0xff]
        %v320 = vld [vmem:[%s272 + $0x18] sm:$0xff]
        %v321 = vld [vmem:[%s272 + $0x20] sm:$0xff]
        %v322 = vld [vmem:[%s272 + $0x28] sm:$0xff]
        %v323 = vld [vmem:[%s272 + $0x30] sm:$0xff]
        %v324 = vld [vmem:[%s272 + $0x38] sm:$0xff]
        %v325 = vld [vmem:[%s272 + $0x40] sm:$0xff]
        %v326 = vld [vmem:[%s272 + $0x48] sm:$0xff]
        %v327 = vld [vmem:[%s272 + $0x50] sm:$0xff]
        %v328 = vld [vmem:[%s272 + $0x58] sm:$0xff]
        %v329 = vld [vmem:[%s272 + $0x60] sm:$0xff]
        %v330 = vld [vmem:[%s272 + $0x68] sm:$0xff]
        %v331 = vld [vmem:[%s272 + $0x70] sm:$0xff]
        %v332 = vld [vmem:[%s272 + $0x78] sm:$0xff]
        %v333 = vld [vmem:[%s272 + $0x80] sm:$0xff]
        %v334 = vld [vmem:[%s272 + $0x88] sm:$0xff]
        %v335 = vld [vmem:[%s272 + $0x90] sm:$0xff]
        %v336 = vld [vmem:[%s272 + $0x98] sm:$0xff]
        %v337 = vld [vmem:[%s272 + $0xa0] sm:$0xff]
        %v338 = vld [vmem:[%s272 + $0xa8] sm:$0xff]
        %v339 = vld [vmem:[%s272 + $0xb0] sm:$0xff]
        %v340 = vld [vmem:[%s272 + $0xb8] sm:$0xff]
        %v341 = vld [vmem:[%s272 + $0xc0] sm:$0xff]
        %v342 = vld [vmem:[%s272 + $0xc8] sm:$0xff]
        %v343 = vld [vmem:[%s272 + $0xd0] sm:$0xff]
        %v344 = vld [vmem:[%s272 + $0xd8] sm:$0xff]
        %v345 = vld [vmem:[%s272 + $0xe0] sm:$0xff]
        %v346 = vld [vmem:[%s272 + $0xe8] sm:$0xff]
        %v347 = vld [vmem:[%s272 + $0xf0] sm:$0xff]
        %v348 = vld [vmem:[%s272 + $0xf8] sm:$0xff]
        %s349 = sshra.s32 %s316, 3
        %s350 = sand.u32 %s316, 7
        %s351 = smul.u32 %s349, 2
        %s352 = smul.addr %s351, 8
        %s353 = scalar_lea.vmem %s272, %s352 [#allocation2]
        %v354 = vld [vmem:[%s353] sm:$0xff]
        %v355 = vld [vmem:[%s353 + $0x8] sm:$0xff]
        %v356 = vld [vmem:[%s353 + $0x10] sm:$0xff]
        %v357 = vld [vmem:[%s353 + $0x18] sm:$0xff]
        %v358 = vld [vmem:[%s353 + $0x20] sm:$0xff]
        %v359 = vld [vmem:[%s353 + $0x28] sm:$0xff]
        %v360 = vld [vmem:[%s353 + $0x30] sm:$0xff]
        %v361 = vld [vmem:[%s353 + $0x38] sm:$0xff]
        %v362 = vld [vmem:[%s353 + $0x40] sm:$0xff]
        %v363 = vld [vmem:[%s353 + $0x48] sm:$0xff]
        %v364 = vld [vmem:[%s353 + $0x50] sm:$0xff]
        %v365 = vld [vmem:[%s353 + $0x58] sm:$0xff]
        %v366 = vld [vmem:[%s353 + $0x60] sm:$0xff]
        %v367 = vld [vmem:[%s353 + $0x68] sm:$0xff]
        %v368 = vld [vmem:[%s353 + $0x70] sm:$0xff]
        %v369 = vld [vmem:[%s353 + $0x78] sm:$0xff]
        %v370 = vld [vmem:[#allocation5] sm:$0xff]
        %v371 = vld [vmem:[#allocation5 + $0x8] sm:$0xff]
        %v372 = vld [vmem:[#allocation5 + $0x20] sm:$0xff]
        %v373 = vld [vmem:[#allocation5 + $0x28] sm:$0xff]
        %v374 = vld [vmem:[#allocation5 + $0x40] sm:$0xff]
        %v375 = vld [vmem:[#allocation5 + $0x48] sm:$0xff]
        %v376 = vld [vmem:[#allocation5 + $0x60] sm:$0xff]
        %v377 = vld [vmem:[#allocation5 + $0x68] sm:$0xff]
        %v378 = vld [vmem:[#allocation5 + $0x80] sm:$0xff]
        %v379 = vld [vmem:[#allocation5 + $0x88] sm:$0xff]
        %v380 = vld [vmem:[#allocation5 + $0xa0] sm:$0xff]
        %v381 = vld [vmem:[#allocation5 + $0xa8] sm:$0xff]
        %v382 = vld [vmem:[#allocation5 + $0xc0] sm:$0xff]
        %v383 = vld [vmem:[#allocation5 + $0xc8] sm:$0xff]
        %v384 = vld [vmem:[#allocation5 + $0xe0] sm:$0xff]
        %v385 = vld [vmem:[#allocation5 + $0xe8] sm:$0xff]
        %v386 = vld [vmem:[#allocation5 + $0x100] sm:$0xff]
        %v387 = vld [vmem:[#allocation5 + $0x108] sm:$0xff]
        %v388 = vld [vmem:[#allocation5 + $0x120] sm:$0xff]
        %v389 = vld [vmem:[#allocation5 + $0x128] sm:$0xff]
        %v390 = vld [vmem:[#allocation5 + $0x140] sm:$0xff]
        %v391 = vld [vmem:[#allocation5 + $0x148] sm:$0xff]
        %v392 = vld [vmem:[#allocation5 + $0x160] sm:$0xff]
        %v393 = vld [vmem:[#allocation5 + $0x168] sm:$0xff]
        %v394 = vld [vmem:[#allocation5 + $0x180] sm:$0xff]
        %v395 = vld [vmem:[#allocation5 + $0x188] sm:$0xff]
        %v396 = vld [vmem:[#allocation5 + $0x1a0] sm:$0xff]
        %v397 = vld [vmem:[#allocation5 + $0x1a8] sm:$0xff]
        %v398 = vld [vmem:[#allocation5 + $0x1c0] sm:$0xff]
        %v399 = vld [vmem:[#allocation5 + $0x1c8] sm:$0xff]
        %v400 = vld [vmem:[#allocation5 + $0x1e0] sm:$0xff]
        %v401 = vld [vmem:[#allocation5 + $0x1e8] sm:$0xff]
        %v402 = vld [vmem:[#allocation5 + $0x200] sm:$0xff]
        %v403 = vld [vmem:[#allocation5 + $0x208] sm:$0xff]
        %v404 = vld [vmem:[#allocation5 + $0x220] sm:$0xff]
        %v405 = vld [vmem:[#allocation5 + $0x228] sm:$0xff]
        %v406 = vld [vmem:[#allocation5 + $0x240] sm:$0xff]
        %v407 = vld [vmem:[#allocation5 + $0x248] sm:$0xff]
        %v408 = vld [vmem:[#allocation5 + $0x260] sm:$0xff]
        %v409 = vld [vmem:[#allocation5 + $0x268] sm:$0xff]
        %v410 = vld [vmem:[#allocation5 + $0x280] sm:$0xff]
        %v411 = vld [vmem:[#allocation5 + $0x288] sm:$0xff]
        %v412 = vld [vmem:[#allocation5 + $0x2a0] sm:$0xff]
        %v413 = vld [vmem:[#allocation5 + $0x2a8] sm:$0xff]
        %v414 = vld [vmem:[#allocation5 + $0x2c0] sm:$0xff]
        %v415 = vld [vmem:[#allocation5 + $0x2c8] sm:$0xff]
        %v416 = vld [vmem:[#allocation5 + $0x2e0] sm:$0xff]
        %v417 = vld [vmem:[#allocation5 + $0x2e8] sm:$0xff]
        %v418 = vld [vmem:[#allocation5 + $0x300] sm:$0xff]
        %v419 = vld [vmem:[#allocation5 + $0x308] sm:$0xff]
        %v420 = vld [vmem:[#allocation5 + $0x320] sm:$0xff]
        %v421 = vld [vmem:[#allocation5 + $0x328] sm:$0xff]
        %v422 = vld [vmem:[#allocation5 + $0x340] sm:$0xff]
        %v423 = vld [vmem:[#allocation5 + $0x348] sm:$0xff]
        %v424 = vld [vmem:[#allocation5 + $0x360] sm:$0xff]
        %v425 = vld [vmem:[#allocation5 + $0x368] sm:$0xff]
        %v426 = vld [vmem:[#allocation5 + $0x380] sm:$0xff]
        %v427 = vld [vmem:[#allocation5 + $0x388] sm:$0xff]
        %v428 = vld [vmem:[#allocation5 + $0x3a0] sm:$0xff]
        %v429 = vld [vmem:[#allocation5 + $0x3a8] sm:$0xff]
        %v430 = vld [vmem:[#allocation5 + $0x3c0] sm:$0xff]
        %v431 = vld [vmem:[#allocation5 + $0x3c8] sm:$0xff]
        %v432 = vld [vmem:[#allocation5 + $0x3e0] sm:$0xff]
        %v433 = vld [vmem:[#allocation5 + $0x3e8] sm:$0xff]
        %v434 = vld [vmem:[#allocation5 + $0x10] sm:$0xff]
        %v435 = vld [vmem:[#allocation5 + $0x18] sm:$0xff]
        %v436 = vld [vmem:[#allocation5 + $0x30] sm:$0xff]
        %v437 = vld [vmem:[#allocation5 + $0x38] sm:$0xff]
        %v438 = vld [vmem:[#allocation5 + $0x50] sm:$0xff]
        %v439 = vld [vmem:[#allocation5 + $0x58] sm:$0xff]
        %v440 = vld [vmem:[#allocation5 + $0x70] sm:$0xff]
        %v441 = vld [vmem:[#allocation5 + $0x78] sm:$0xff]
        %v442 = vld [vmem:[#allocation5 + $0x90] sm:$0xff]
        %v443 = vld [vmem:[#allocation5 + $0x98] sm:$0xff]
        %v444 = vld [vmem:[#allocation5 + $0xb0] sm:$0xff]
        %v445 = vld [vmem:[#allocation5 + $0xb8] sm:$0xff]
        %v446 = vld [vmem:[#allocation5 + $0xd0] sm:$0xff]
        %v447 = vld [vmem:[#allocation5 + $0xd8] sm:$0xff]
        %v448 = vld [vmem:[#allocation5 + $0xf0] sm:$0xff]
        %v449 = vld [vmem:[#allocation5 + $0xf8] sm:$0xff]
        %v450 = vld [vmem:[#allocation5 + $0x110] sm:$0xff]
        %v451 = vld [vmem:[#allocation5 + $0x118] sm:$0xff]
        %v452 = vld [vmem:[#allocation5 + $0x130] sm:$0xff]
        %v453 = vld [vmem:[#allocation5 + $0x138] sm:$0xff]
        %v454 = vld [vmem:[#allocation5 + $0x150] sm:$0xff]
        %v455 = vld [vmem:[#allocation5 + $0x158] sm:$0xff]
        %v456 = vld [vmem:[#allocation5 + $0x170] sm:$0xff]
        %v457 = vld [vmem:[#allocation5 + $0x178] sm:$0xff]
        %v458 = vld [vmem:[#allocation5 + $0x190] sm:$0xff]
        %v459 = vld [vmem:[#allocation5 + $0x198] sm:$0xff]
        %v460 = vld [vmem:[#allocation5 + $0x1b0] sm:$0xff]
        %v461 = vld [vmem:[#allocation5 + $0x1b8] sm:$0xff]
        %v462 = vld [vmem:[#allocation5 + $0x1d0] sm:$0xff]
        %v463 = vld [vmem:[#allocation5 + $0x1d8] sm:$0xff]
        %v464 = vld [vmem:[#allocation5 + $0x1f0] sm:$0xff]
        %v465 = vld [vmem:[#allocation5 + $0x1f8] sm:$0xff]
        %v466 = vld [vmem:[#allocation5 + $0x210] sm:$0xff]
        %v467 = vld [vmem:[#allocation5 + $0x218] sm:$0xff]
        %v468 = vld [vmem:[#allocation5 + $0x230] sm:$0xff]
        %v469 = vld [vmem:[#allocation5 + $0x238] sm:$0xff]
        %v470 = vld [vmem:[#allocation5 + $0x250] sm:$0xff]
        %v471 = vld [vmem:[#allocation5 + $0x258] sm:$0xff]
        %v472 = vld [vmem:[#allocation5 + $0x270] sm:$0xff]
        %v473 = vld [vmem:[#allocation5 + $0x278] sm:$0xff]
        %v474 = vld [vmem:[#allocation5 + $0x290] sm:$0xff]
        %v475 = vld [vmem:[#allocation5 + $0x298] sm:$0xff]
        %v476 = vld [vmem:[#allocation5 + $0x2b0] sm:$0xff]
        %v477 = vld [vmem:[#allocation5 + $0x2b8] sm:$0xff]
        %v478 = vld [vmem:[#allocation5 + $0x2d0] sm:$0xff]
        %v479 = vld [vmem:[#allocation5 + $0x2d8] sm:$0xff]
        %v480 = vld [vmem:[#allocation5 + $0x2f0] sm:$0xff]
        %v481 = vld [vmem:[#allocation5 + $0x2f8] sm:$0xff]
        %v482 = vld [vmem:[#allocation5 + $0x310] sm:$0xff]
        %v483 = vld [vmem:[#allocation5 + $0x318] sm:$0xff]
        %v484 = vld [vmem:[#allocation5 + $0x330] sm:$0xff]
        %v485 = vld [vmem:[#allocation5 + $0x338] sm:$0xff]
        %v486 = vld [vmem:[#allocation5 + $0x350] sm:$0xff]
        %v487 = vld [vmem:[#allocation5 + $0x358] sm:$0xff]
        %v488 = vld [vmem:[#allocation5 + $0x370] sm:$0xff]
        %v489 = vld [vmem:[#allocation5 + $0x378] sm:$0xff]
        %v490 = vld [vmem:[#allocation5 + $0x390] sm:$0xff]
        %v491 = vld [vmem:[#allocation5 + $0x398] sm:$0xff]
        %v492 = vld [vmem:[#allocation5 + $0x3b0] sm:$0xff]
        %v493 = vld [vmem:[#allocation5 + $0x3b8] sm:$0xff]
        %v494 = vld [vmem:[#allocation5 + $0x3d0] sm:$0xff]
        %v495 = vld [vmem:[#allocation5 + $0x3d8] sm:$0xff]
        %v496 = vld [vmem:[#allocation5 + $0x3f0] sm:$0xff]
        %v497 = vld [vmem:[#allocation5 + $0x3f8] sm:$0xff]
        %498 = vmatprep.subr.mxu0 %v401
        %499 = vmatpush1.msra.mxu0 %v400
        %500 = vmatprep.subr.mxu0 %v399
        %501 = vmatpush1.msra.mxu0 %v398
        %502 = vmatprep.subr.mxu0 %v397
        %503 = vmatpush1.msra.mxu0 %v396
        %504 = vmatprep.subr.mxu0 %v395
        %505 = vmatpush1.msra.mxu0 %v394
        %506 = vmatprep.subr.mxu0 %v393
        %507 = vmatpush1.msra.mxu0 %v392
        %508 = vmatprep.subr.mxu0 %v391
        %509 = vmatpush1.msra.mxu0 %v390
        %510 = vmatprep.subr.mxu0 %v389
        %511 = vmatpush1.msra.mxu0 %v388
        %512 = vmatprep.subr.mxu0 %v387
        %513 = vmatpush1.msra.mxu0 %v386
        %514 = vmatprep.subr.mxu0 %v385
        %515 = vmatpush1.msra.mxu0 %v384
        %516 = vmatprep.subr.mxu0 %v383
        %517 = vmatpush1.msra.mxu0 %v382
        %518 = vmatprep.subr.mxu0 %v381
        %519 = vmatpush1.msra.mxu0 %v380
        %520 = vmatprep.subr.mxu0 %v379
        %521 = vmatpush1.msra.mxu0 %v378
        %522 = vmatprep.subr.mxu0 %v377
        %523 = vmatpush1.msra.mxu0 %v376
        %524 = vmatprep.subr.mxu0 %v375
        %525 = vmatpush1.msra.mxu0 %v374
        %526 = vmatprep.subr.mxu0 %v373
        %527 = vmatpush1.msra.mxu0 %v372
        %528 = vmatprep.subr.mxu0 %v371
        %529 = vmatpush1.msra.mxu0 %v370
        %530 = vmatprep.subr.mxu0 %v433
        %531 = vmatpush2.msra.mxu0 %v432
        %532 = vmatprep.subr.mxu0 %v431
        %533 = vmatpush2.msra.mxu0 %v430
        %534 = vmatprep.subr.mxu0 %v429
        %535 = vmatpush2.msra.mxu0 %v428
        %536 = vmatprep.subr.mxu0 %v427
        %537 = vmatpush2.msra.mxu0 %v426
        %538 = vmatprep.subr.mxu0 %v425
        %539 = vmatpush2.msra.mxu0 %v424
        %540 = vmatprep.subr.mxu0 %v423
        %541 = vmatpush2.msra.mxu0 %v422
        %542 = vmatprep.subr.mxu0 %v421
        %543 = vmatpush2.msra.mxu0 %v420
        %544 = vmatprep.subr.mxu0 %v419
        %545 = vmatpush2.msra.mxu0 %v418
        %546 = vmatprep.subr.mxu0 %v417
        %547 = vmatpush2.msra.mxu0 %v416
        %548 = vmatprep.subr.mxu0 %v415
        %549 = vmatpush2.msra.mxu0 %v414
        %550 = vmatprep.subr.mxu0 %v413
        %551 = vmatpush2.msra.mxu0 %v412
        %552 = vmatprep.subr.mxu0 %v411
        %553 = vmatpush2.msra.mxu0 %v410
        %554 = vmatprep.subr.mxu0 %v409
        %555 = vmatpush2.msra.mxu0 %v408
        %556 = vmatprep.subr.mxu0 %v407
        %557 = vmatpush2.msra.mxu0 %v406
        %558 = vmatprep.subr.mxu0 %v405
        %559 = vmatpush2.msra.mxu0 %v404
        %560 = vmatprep.subr.mxu0 %v403
        %561 = vmatpush2.msra.mxu0 %v402
        %562 = vmatprep.mubr.f32.mxu0 %v355
        %563 = vmatmul.mubr.f32.gmra.mxu0 %v354
        %v564 = vpop.f32.mrf.mxu0
        %v565 = vadd.f32 0.0, %v564
        %v566 = vpop.f32.mrf.mxu0
        %v567 = vadd.f32 0.0, %v566
        %568 = vmatprep.mubr.f32.mxu0 %v357
        %569 = vmatmul.mubr.f32.gmra.mxu0 %v356
        %v570 = vpop.f32.mrf.mxu0
        %v571 = vadd.f32 0.0, %v570
        %v572 = vpop.f32.mrf.mxu0
        %v573 = vadd.f32 0.0, %v572
        %574 = vmatprep.mubr.f32.mxu0 %v359
        %575 = vmatmul.mubr.f32.gmra.mxu0 %v358
        %v576 = vpop.f32.mrf.mxu0
        %v577 = vadd.f32 0.0, %v576
        %v578 = vpop.f32.mrf.mxu0
        %v579 = vadd.f32 0.0, %v578
        %580 = vmatprep.mubr.f32.mxu0 %v361
        %581 = vmatmul.mubr.f32.gmra.mxu0 %v360
        %v582 = vpop.f32.mrf.mxu0
        %v583 = vadd.f32 0.0, %v582
        %v584 = vpop.f32.mrf.mxu0
        %v585 = vadd.f32 0.0, %v584
        %586 = vmatprep.mubr.f32.mxu0 %v363
        %587 = vmatmul.mubr.f32.gmra.mxu0 %v362
        %v588 = vpop.f32.mrf.mxu0
        %v589 = vadd.f32 0.0, %v588
        %v590 = vpop.f32.mrf.mxu0
        %v591 = vadd.f32 0.0, %v590
        %592 = vmatprep.mubr.f32.mxu0 %v365
        %593 = vmatmul.mubr.f32.gmra.mxu0 %v364
        %v594 = vpop.f32.mrf.mxu0
        %v595 = vadd.f32 0.0, %v594
        %v596 = vpop.f32.mrf.mxu0
        %v597 = vadd.f32 0.0, %v596
        %598 = vmatprep.mubr.f32.mxu0 %v367
        %599 = vmatmul.mubr.f32.gmra.mxu0 %v366
        %v600 = vpop.f32.mrf.mxu0
        %v601 = vadd.f32 0.0, %v600
        %v602 = vpop.f32.mrf.mxu0
        %v603 = vadd.f32 0.0, %v602
        %604 = vmatprep.mubr.f32.mxu0 %v369
        %605 = vmatmul.mubr.f32.gmra.mxu0 %v368
        %v606 = vpop.f32.mrf.mxu0
        %v607 = vadd.f32 0.0, %v606
        %v608 = vpop.f32.mrf.mxu0
        %v609 = vadd.f32 0.0, %v608
        %610 = vdwg.mxu0
        %611 = vmatprep.subr.mxu0 %v465
        %612 = vmatpush1.msra.mxu0 %v464
        %613 = vmatprep.subr.mxu0 %v463
        %614 = vmatpush1.msra.mxu0 %v462
        %615 = vmatprep.subr.mxu0 %v461
        %616 = vmatpush1.msra.mxu0 %v460
        %617 = vmatprep.subr.mxu0 %v459
        %618 = vmatpush1.msra.mxu0 %v458
        %619 = vmatprep.subr.mxu0 %v457
        %620 = vmatpush1.msra.mxu0 %v456
        %621 = vmatprep.subr.mxu0 %v455
        %622 = vmatpush1.msra.mxu0 %v454
        %623 = vmatprep.subr.mxu0 %v453
        %624 = vmatpush1.msra.mxu0 %v452
        %625 = vmatprep.subr.mxu0 %v451
        %626 = vmatpush1.msra.mxu0 %v450
        %627 = vmatprep.subr.mxu0 %v449
        %628 = vmatpush1.msra.mxu0 %v448
        %629 = vmatprep.subr.mxu0 %v447
        %630 = vmatpush1.msra.mxu0 %v446
        %631 = vmatprep.subr.mxu0 %v445
        %632 = vmatpush1.msra.mxu0 %v444
        %633 = vmatprep.subr.mxu0 %v443
        %634 = vmatpush1.msra.mxu0 %v442
        %635 = vmatprep.subr.mxu0 %v441
        %636 = vmatpush1.msra.mxu0 %v440
        %637 = vmatprep.subr.mxu0 %v439
        %638 = vmatpush1.msra.mxu0 %v438
        %639 = vmatprep.subr.mxu0 %v437
        %640 = vmatpush1.msra.mxu0 %v436
        %641 = vmatprep.subr.mxu0 %v435
        %642 = vmatpush1.msra.mxu0 %v434
        %643 = vmatprep.subr.mxu0 %v497
        %644 = vmatpush2.msra.mxu0 %v496
        %645 = vmatprep.subr.mxu0 %v495
        %646 = vmatpush2.msra.mxu0 %v494
        %647 = vmatprep.subr.mxu0 %v493
        %648 = vmatpush2.msra.mxu0 %v492
        %649 = vmatprep.subr.mxu0 %v491
        %650 = vmatpush2.msra.mxu0 %v490
        %651 = vmatprep.subr.mxu0 %v489
        %652 = vmatpush2.msra.mxu0 %v488
        %653 = vmatprep.subr.mxu0 %v487
        %654 = vmatpush2.msra.mxu0 %v486
        %655 = vmatprep.subr.mxu0 %v485
        %656 = vmatpush2.msra.mxu0 %v484
        %657 = vmatprep.subr.mxu0 %v483
        %658 = vmatpush2.msra.mxu0 %v482
        %659 = vmatprep.subr.mxu0 %v481
        %660 = vmatpush2.msra.mxu0 %v480
        %661 = vmatprep.subr.mxu0 %v479
        %662 = vmatpush2.msra.mxu0 %v478
        %663 = vmatprep.subr.mxu0 %v477
        %664 = vmatpush2.msra.mxu0 %v476
        %665 = vmatprep.subr.mxu0 %v475
        %666 = vmatpush2.msra.mxu0 %v474
        %667 = vmatprep.subr.mxu0 %v473
        %668 = vmatpush2.msra.mxu0 %v472
        %669 = vmatprep.subr.mxu0 %v471
        %670 = vmatpush2.msra.mxu0 %v470
        %671 = vmatprep.subr.mxu0 %v469
        %672 = vmatpush2.msra.mxu0 %v468
        %673 = vmatprep.subr.mxu0 %v467
        %674 = vmatpush2.msra.mxu0 %v466
        %675 = vmatprep.mubr.f32.mxu0 %v318
        %676 = vmatmul.mubr.f32.gmra.mxu0 %v317
        %v677 = vpop.f32.mrf.mxu0
        %v678 = vadd.f32 0.0, %v677
        %v679 = vpop.f32.mrf.mxu0
        %v680 = vadd.f32 0.0, %v679
        %681 = vmatprep.mubr.f32.mxu0 %v320
        %682 = vmatmul.mubr.f32.gmra.mxu0 %v319
        %v683 = vpop.f32.mrf.mxu0
        %v684 = vadd.f32 0.0, %v683
        %v685 = vpop.f32.mrf.mxu0
        %v686 = vadd.f32 0.0, %v685
        %687 = vmatprep.mubr.f32.mxu0 %v322
        %688 = vmatmul.mubr.f32.gmra.mxu0 %v321
        %v689 = vpop.f32.mrf.mxu0
        %v690 = vadd.f32 0.0, %v689
        %v691 = vpop.f32.mrf.mxu0
        %v692 = vadd.f32 0.0, %v691
        %693 = vmatprep.mubr.f32.mxu0 %v324
        %694 = vmatmul.mubr.f32.gmra.mxu0 %v323
        %v695 = vpop.f32.mrf.mxu0
        %v696 = vadd.f32 0.0, %v695
        %v697 = vpop.f32.mrf.mxu0
        %v698 = vadd.f32 0.0, %v697
        %699 = vmatprep.mubr.f32.mxu0 %v326
        %700 = vmatmul.mubr.f32.gmra.mxu0 %v325
        %v701 = vpop.f32.mrf.mxu0
        %v702 = vadd.f32 0.0, %v701
        %v703 = vpop.f32.mrf.mxu0
        %v704 = vadd.f32 0.0, %v703
        %705 = vmatprep.mubr.f32.mxu0 %v328
        %706 = vmatmul.mubr.f32.gmra.mxu0 %v327
        %v707 = vpop.f32.mrf.mxu0
        %v708 = vadd.f32 0.0, %v707
        %v709 = vpop.f32.mrf.mxu0
        %v710 = vadd.f32 0.0, %v709
        %711 = vmatprep.mubr.f32.mxu0 %v330
        %712 = vmatmul.mubr.f32.gmra.mxu0 %v329
        %v713 = vpop.f32.mrf.mxu0
        %v714 = vadd.f32 0.0, %v713
        %v715 = vpop.f32.mrf.mxu0
        %v716 = vadd.f32 0.0, %v715
        %717 = vmatprep.mubr.f32.mxu0 %v332
        %718 = vmatmul.mubr.f32.gmra.mxu0 %v331
        %v719 = vpop.f32.mrf.mxu0
        %v720 = vadd.f32 0.0, %v719
        %v721 = vpop.f32.mrf.mxu0
        %v722 = vadd.f32 0.0, %v721
        %723 = vmatprep.mubr.f32.mxu0 %v334
        %724 = vmatmul.mubr.f32.gmra.mxu0 %v333
        %v725 = vpop.f32.mrf.mxu0
        %v726 = vadd.f32 0.0, %v725
        %v727 = vpop.f32.mrf.mxu0
        %v728 = vadd.f32 0.0, %v727
        %729 = vmatprep.mubr.f32.mxu0 %v336
        %730 = vmatmul.mubr.f32.gmra.mxu0 %v335
        %v731 = vpop.f32.mrf.mxu0
        %v732 = vadd.f32 0.0, %v731
        %v733 = vpop.f32.mrf.mxu0
        %v734 = vadd.f32 0.0, %v733
        %735 = vmatprep.mubr.f32.mxu0 %v338
        %736 = vmatmul.mubr.f32.gmra.mxu0 %v337
        %v737 = vpop.f32.mrf.mxu0
        %v738 = vadd.f32 0.0, %v737
        %v739 = vpop.f32.mrf.mxu0
        %v740 = vadd.f32 0.0, %v739
        %741 = vmatprep.mubr.f32.mxu0 %v340
        %742 = vmatmul.mubr.f32.gmra.mxu0 %v339
        %v743 = vpop.f32.mrf.mxu0
        %v744 = vadd.f32 0.0, %v743
        %v745 = vpop.f32.mrf.mxu0
        %v746 = vadd.f32 0.0, %v745
        %747 = vmatprep.mubr.f32.mxu0 %v342
        %748 = vmatmul.mubr.f32.gmra.mxu0 %v341
        %v749 = vpop.f32.mrf.mxu0
        %v750 = vadd.f32 0.0, %v749
        %v751 = vpop.f32.mrf.mxu0
        %v752 = vadd.f32 0.0, %v751
        %753 = vmatprep.mubr.f32.mxu0 %v344
        %754 = vmatmul.mubr.f32.gmra.mxu0 %v343
        %v755 = vpop.f32.mrf.mxu0
        %v756 = vadd.f32 0.0, %v755
        %v757 = vpop.f32.mrf.mxu0
        %v758 = vadd.f32 0.0, %v757
        %759 = vmatprep.mubr.f32.mxu0 %v346
        %760 = vmatmul.mubr.f32.gmra.mxu0 %v345
        %v761 = vpop.f32.mrf.mxu0
        %v762 = vadd.f32 0.0, %v761
        %v763 = vpop.f32.mrf.mxu0
        %v764 = vadd.f32 0.0, %v763
        %765 = vmatprep.mubr.f32.mxu0 %v348
        %766 = vmatmul.mubr.f32.gmra.mxu0 %v347
        %v767 = vpop.f32.mrf.mxu0
        %v768 = vadd.f32 0.0, %v767
        %v769 = vpop.f32.mrf.mxu0
        %v770 = vadd.f32 0.0, %v769
        %771 = vdwg.mxu0
        %v772 = vld [vmem:[#allocation8] sm:$0xff]
        %v773 = vld [vmem:[#allocation8 + $0x8] sm:$0xff]
        %v774 = vld [vmem:[#allocation8 + $0x10] sm:$0xff]
        %v775 = vld [vmem:[#allocation8 + $0x18] sm:$0xff]
        %v776 = vld [vmem:[#allocation8 + $0x20] sm:$0xff]
        %v777 = vld [vmem:[#allocation8 + $0x28] sm:$0xff]
        %v778 = vld [vmem:[#allocation8 + $0x30] sm:$0xff]
        %v779 = vld [vmem:[#allocation8 + $0x38] sm:$0xff]
        %v780 = vld [vmem:[#allocation8 + $0x40] sm:$0xff]
        %v781 = vld [vmem:[#allocation8 + $0x48] sm:$0xff]
        %v782 = vld [vmem:[#allocation8 + $0x50] sm:$0xff]
        %v783 = vld [vmem:[#allocation8 + $0x58] sm:$0xff]
        %v784 = vld [vmem:[#allocation8 + $0x60] sm:$0xff]
        %v785 = vld [vmem:[#allocation8 + $0x68] sm:$0xff]
        %v786 = vld [vmem:[#allocation8 + $0x70] sm:$0xff]
        %v787 = vld [vmem:[#allocation8 + $0x78] sm:$0xff]
        %v788 = vld [vmem:[#allocation10] sm:$0xff]
        %v789 = vld [vmem:[#allocation10 + $0x8] sm:$0xff]
        %v790 = vld [vmem:[#allocation10 + $0x10] sm:$0xff]
        %v791 = vld [vmem:[#allocation10 + $0x18] sm:$0xff]
        %v792 = vld [vmem:[#allocation10 + $0x20] sm:$0xff]
        %v793 = vld [vmem:[#allocation10 + $0x28] sm:$0xff]
        %v794 = vld [vmem:[#allocation10 + $0x30] sm:$0xff]
        %v795 = vld [vmem:[#allocation10 + $0x38] sm:$0xff]
        %v796 = vld [vmem:[#allocation10 + $0x40] sm:$0xff]
        %v797 = vld [vmem:[#allocation10 + $0x48] sm:$0xff]
        %v798 = vld [vmem:[#allocation10 + $0x50] sm:$0xff]
        %v799 = vld [vmem:[#allocation10 + $0x58] sm:$0xff]
        %v800 = vld [vmem:[#allocation10 + $0x60] sm:$0xff]
        %v801 = vld [vmem:[#allocation10 + $0x68] sm:$0xff]
        %v802 = vld [vmem:[#allocation10 + $0x70] sm:$0xff]
        %v803 = vld [vmem:[#allocation10 + $0x78] sm:$0xff]
        %s804 = scalar_lea.vmem [#allocation8], %s316
        %v805 = vld [vmem:[%s804] sm:$0xff]
        %v806 = vld [vmem:[%s804 + $0x8] sm:$0xff]
        %v807 = vld [vmem:[%s804 + $0x10] sm:$0xff]
        %v808 = vld [vmem:[%s804 + $0x18] sm:$0xff]
        %v809 = vld [vmem:[%s804 + $0x20] sm:$0xff]
        %v810 = vld [vmem:[%s804 + $0x28] sm:$0xff]
        %v811 = vld [vmem:[%s804 + $0x30] sm:$0xff]
        %v812 = vld [vmem:[%s804 + $0x38] sm:$0xff]
        %s813 = scalar_lea.vmem [#allocation10], %s316
        %v814 = vld [vmem:[%s813] sm:$0xff]
        %v815 = vld [vmem:[%s813 + $0x8] sm:$0xff]
        %v816 = vld [vmem:[%s813 + $0x10] sm:$0xff]
        %v817 = vld [vmem:[%s813 + $0x18] sm:$0xff]
        %v818 = vld [vmem:[%s813 + $0x20] sm:$0xff]
        %v819 = vld [vmem:[%s813 + $0x28] sm:$0xff]
        %v820 = vld [vmem:[%s813 + $0x30] sm:$0xff]
        %v821 = vld [vmem:[%s813 + $0x38] sm:$0xff]
        %v822 = vmul.f32 %v678, %v772
        %v823 = vmul.f32 %v684, %v773
        %v824 = vmul.f32 %v690, %v774
        %v825 = vmul.f32 %v696, %v775
        %v826 = vmul.f32 %v702, %v776
        %v827 = vmul.f32 %v708, %v777
        %v828 = vmul.f32 %v714, %v778
        %v829 = vmul.f32 %v720, %v779
        %v830 = vmul.f32 %v726, %v780
        %v831 = vmul.f32 %v732, %v781
        %v832 = vmul.f32 %v738, %v782
        %v833 = vmul.f32 %v744, %v783
        %v834 = vmul.f32 %v750, %v784
        %v835 = vmul.f32 %v756, %v785
        %v836 = vmul.f32 %v762, %v786
        %v837 = vmul.f32 %v768, %v787
        %838 = vrot.lane.b32.xlu0 %v678, 64
        %v839 = vpop.permute.xlu0 %838
        %840 = vrot.lane.b32.xlu0 %v684, 64
        %v841 = vpop.permute.xlu0 %840
        %842 = vrot.lane.b32.xlu0 %v690, 64
        %v843 = vpop.permute.xlu0 %842
        %844 = vrot.lane.b32.xlu0 %v696, 64
        %v845 = vpop.permute.xlu0 %844
        %846 = vrot.lane.b32.xlu0 %v702, 64
        %v847 = vpop.permute.xlu0 %846
        %848 = vrot.lane.b32.xlu0 %v708, 64
        %v849 = vpop.permute.xlu0 %848
        %850 = vrot.lane.b32.xlu0 %v714, 64
        %v851 = vpop.permute.xlu0 %850
        %852 = vrot.lane.b32.xlu0 %v720, 64
        %v853 = vpop.permute.xlu0 %852
        %854 = vrot.lane.b32.xlu0 %v726, 64
        %v855 = vpop.permute.xlu0 %854
        %856 = vrot.lane.b32.xlu0 %v732, 64
        %v857 = vpop.permute.xlu0 %856
        %858 = vrot.lane.b32.xlu0 %v738, 64
        %v859 = vpop.permute.xlu0 %858
        %860 = vrot.lane.b32.xlu0 %v744, 64
        %v861 = vpop.permute.xlu0 %860
        %862 = vrot.lane.b32.xlu0 %v750, 64
        %v863 = vpop.permute.xlu0 %862
        %864 = vrot.lane.b32.xlu0 %v756, 64
        %v865 = vpop.permute.xlu0 %864
        %866 = vrot.lane.b32.xlu0 %v762, 64
        %v867 = vpop.permute.xlu0 %866
        %868 = vrot.lane.b32.xlu0 %v768, 64
        %v869 = vpop.permute.xlu0 %868
        %v870 = vmul.f32 %v839, %v788
        %v871 = vmul.f32 %v841, %v789
        %v872 = vmul.f32 %v843, %v790
        %v873 = vmul.f32 %v845, %v791
        %v874 = vmul.f32 %v847, %v792
        %v875 = vmul.f32 %v849, %v793
        %v876 = vmul.f32 %v851, %v794
        %v877 = vmul.f32 %v853, %v795
        %v878 = vmul.f32 %v855, %v796
        %v879 = vmul.f32 %v857, %v797
        %v880 = vmul.f32 %v859, %v798
        %v881 = vmul.f32 %v861, %v799
        %v882 = vmul.f32 %v863, %v800
        %v883 = vmul.f32 %v865, %v801
        %v884 = vmul.f32 %v867, %v802
        %v885 = vmul.f32 %v869, %v803
        %v886 = vadd.f32 %v822, %v870
        %v887 = vadd.f32 %v823, %v871
        %v888 = vadd.f32 %v824, %v872
        %v889 = vadd.f32 %v825, %v873
        %v890 = vadd.f32 %v826, %v874
        %v891 = vadd.f32 %v827, %v875
        %v892 = vadd.f32 %v828, %v876
        %v893 = vadd.f32 %v829, %v877
        %v894 = vadd.f32 %v830, %v878
        %v895 = vadd.f32 %v831, %v879
        %v896 = vadd.f32 %v832, %v880
        %v897 = vadd.f32 %v833, %v881
        %v898 = vadd.f32 %v834, %v882
        %v899 = vadd.f32 %v835, %v883
        %v900 = vadd.f32 %v836, %v884
        %v901 = vadd.f32 %v837, %v885
        %v902 = vlaneseq
        %v903 = vshrl.u32 %v902, 7
        %v904 = vadd.s32 %v903, 8
        %v905 = vadd.s32 %v903, 16
        %v906 = vadd.s32 %v903, 24
        %v907 = vadd.s32 %v903, 32
        %v908 = vadd.s32 %v903, 40
        %v909 = vadd.s32 %v903, 48
        %v910 = vadd.s32 %v903, 56
        %v911 = vstv %s316
        %v912 = vadd.s32 %v903, %v911
        %v913 = vadd.s32 %v904, %v911
        %v914 = vadd.s32 %v905, %v911
        %v915 = vadd.s32 %v906, %v911
        %v916 = vadd.s32 %v907, %v911
        %v917 = vadd.s32 %v908, %v911
        %v918 = vadd.s32 %v909, %v911
        %v919 = vadd.s32 %v910, %v911
        %v920 = vlaneseq
        %v921 = vand.u32 %v920, 127
        %vm922 = vcmp.le.s32.totalorder %v921, %v912
        %vm923 = vcmp.le.s32.totalorder %v921, %v913
        %vm924 = vcmp.le.s32.totalorder %v921, %v914
        %vm925 = vcmp.le.s32.totalorder %v921, %v915
        %vm926 = vcmp.le.s32.totalorder %v921, %v916
        %vm927 = vcmp.le.s32.totalorder %v921, %v917
        %vm928 = vcmp.le.s32.totalorder %v921, %v918
        %vm929 = vcmp.le.s32.totalorder %v921, %v919
        %v930 = vmul.f32 %v565, %v805
        %v931 = vmul.f32 %v571, %v806
        %v932 = vmul.f32 %v577, %v807
        %v933 = vmul.f32 %v583, %v808
        %v934 = vmul.f32 %v589, %v809
        %v935 = vmul.f32 %v595, %v810
        %v936 = vmul.f32 %v601, %v811
        %v937 = vmul.f32 %v607, %v812
        %938 = vrot.lane.b32.xlu0 %v565, 64
        %v939 = vpop.permute.xlu0 %938
        %940 = vrot.lane.b32.xlu0 %v571, 64
        %v941 = vpop.permute.xlu0 %940
        %942 = vrot.lane.b32.xlu0 %v577, 64
        %v943 = vpop.permute.xlu0 %942
        %944 = vrot.lane.b32.xlu0 %v583, 64
        %v945 = vpop.permute.xlu0 %944
        %946 = vrot.lane.b32.xlu0 %v589, 64
        %v947 = vpop.permute.xlu0 %946
        %948 = vrot.lane.b32.xlu0 %v595, 64
        %v949 = vpop.permute.xlu0 %948
        %950 = vrot.lane.b32.xlu0 %v601, 64
        %v951 = vpop.permute.xlu0 %950
        %952 = vrot.lane.b32.xlu0 %v607, 64
        %v953 = vpop.permute.xlu0 %952
        %v954 = vmul.f32 %v939, %v814
        %v955 = vmul.f32 %v941, %v815
        %v956 = vmul.f32 %v943, %v816
        %v957 = vmul.f32 %v945, %v817
        %v958 = vmul.f32 %v947, %v818
        %v959 = vmul.f32 %v949, %v819
        %v960 = vmul.f32 %v951, %v820
        %v961 = vmul.f32 %v953, %v821
        %v962 = vadd.f32 %v930, %v954
        %v963 = vadd.f32 %v931, %v955
        %v964 = vadd.f32 %v932, %v956
        %v965 = vadd.f32 %v933, %v957
        %v966 = vadd.f32 %v934, %v958
        %v967 = vadd.f32 %v935, %v959
        %v968 = vadd.f32 %v936, %v960
        %v969 = vadd.f32 %v937, %v961
        %970 = vmatprep.subr.mxu0 0.0
        %971 = vmatpush1.xpose.msra.mxu0 %v901
        %972 = vmatprep.subr.mxu0 0.0
        %973 = vmatpush1.xpose.msra.mxu0 %v900
        %974 = vmatprep.subr.mxu0 0.0
        %975 = vmatpush1.xpose.msra.mxu0 %v899
        %976 = vmatprep.subr.mxu0 0.0
        %977 = vmatpush1.xpose.msra.mxu0 %v898
        %978 = vmatprep.subr.mxu0 0.0
        %979 = vmatpush1.xpose.msra.mxu0 %v897
        %980 = vmatprep.subr.mxu0 0.0
        %981 = vmatpush1.xpose.msra.mxu0 %v896
        %982 = vmatprep.subr.mxu0 0.0
        %983 = vmatpush1.xpose.msra.mxu0 %v895
        %984 = vmatprep.subr.mxu0 0.0
        %985 = vmatpush1.xpose.msra.mxu0 %v894
        %986 = vmatprep.subr.mxu0 0.0
        %987 = vmatpush1.xpose.msra.mxu0 %v893
        %988 = vmatprep.subr.mxu0 0.0
        %989 = vmatpush1.xpose.msra.mxu0 %v892
        %990 = vmatprep.subr.mxu0 0.0
        %991 = vmatpush1.xpose.msra.mxu0 %v891
        %992 = vmatprep.subr.mxu0 0.0
        %993 = vmatpush1.xpose.msra.mxu0 %v890
        %994 = vmatprep.subr.mxu0 0.0
        %995 = vmatpush1.xpose.msra.mxu0 %v889
        %996 = vmatprep.subr.mxu0 0.0
        %997 = vmatpush1.xpose.msra.mxu0 %v888
        %998 = vmatprep.subr.mxu0 0.0
        %999 = vmatpush1.xpose.msra.mxu0 %v887
        %1000 = vmatprep.subr.mxu0 0.0
        %1001 = vmatpush1.xpose.msra.mxu0 %v886
        %1002 = vmatprep.subr.mxu0 0.0
        %1003 = vmatpush2.xpose.msra.mxu0 0.0
        %1004 = vmatprep.subr.mxu0 0.0
        %1005 = vmatpush2.xpose.msra.mxu0 0.0
        %1006 = vmatprep.subr.mxu0 0.0
        %1007 = vmatpush2.xpose.msra.mxu0 0.0
        %1008 = vmatprep.subr.mxu0 0.0
        %1009 = vmatpush2.xpose.msra.mxu0 0.0
        %1010 = vmatprep.subr.mxu0 0.0
        %1011 = vmatpush2.xpose.msra.mxu0 0.0
        %1012 = vmatprep.subr.mxu0 0.0
        %1013 = vmatpush2.xpose.msra.mxu0 0.0
        %1014 = vmatprep.subr.mxu0 0.0
        %1015 = vmatpush2.xpose.msra.mxu0 0.0
        %1016 = vmatprep.subr.mxu0 0.0
        %1017 = vmatpush2.xpose.msra.mxu0 0.0
        %1018 = vmatprep.subr.mxu0 0.0
        %1019 = vmatpush2.xpose.msra.mxu0 0.0
        %1020 = vmatprep.subr.mxu0 0.0
        %1021 = vmatpush2.xpose.msra.mxu0 0.0
        %1022 = vmatprep.subr.mxu0 0.0
        %1023 = vmatpush2.xpose.msra.mxu0 0.0
        %1024 = vmatprep.subr.mxu0 0.0
        %1025 = vmatpush2.xpose.msra.mxu0 0.0
        %1026 = vmatprep.subr.mxu0 0.0
        %1027 = vmatpush2.xpose.msra.mxu0 0.0
        %1028 = vmatprep.subr.mxu0 0.0
        %1029 = vmatpush2.xpose.msra.mxu0 0.0
        %1030 = vmatprep.subr.mxu0 0.0
        %1031 = vmatpush2.xpose.msra.mxu0 0.0
        %1032 = vmatprep.subr.mxu0 0.0
        %1033 = vmatpush2.xpose.msra.mxu0 0.0
        %1034 = vmatprep.mubr.f32.mxu0 0.0
        %1035 = vmatmul.mubr.f32.gmra.mxu0 %v962
        %v1036 = vpop.f32.mrf.mxu0
        %v1037 = vadd.f32 0.0, %v1036
        %v1038 = vpop.f32.mrf.mxu0
        %1039 = vmatprep.mubr.f32.mxu0 0.0
        %1040 = vmatmul.mubr.f32.gmra.mxu0 %v963
        %v1041 = vpop.f32.mrf.mxu0
        %v1042 = vadd.f32 0.0, %v1041
        %v1043 = vpop.f32.mrf.mxu0
        %1044 = vmatprep.mubr.f32.mxu0 0.0
        %1045 = vmatmul.mubr.f32.gmra.mxu0 %v964
        %v1046 = vpop.f32.mrf.mxu0
        %v1047 = vadd.f32 0.0, %v1046
        %v1048 = vpop.f32.mrf.mxu0
        %1049 = vmatprep.mubr.f32.mxu0 0.0
        %1050 = vmatmul.mubr.f32.gmra.mxu0 %v965
        %v1051 = vpop.f32.mrf.mxu0
        %v1052 = vadd.f32 0.0, %v1051
        %v1053 = vpop.f32.mrf.mxu0
        %1054 = vmatprep.mubr.f32.mxu0 0.0
        %1055 = vmatmul.mubr.f32.gmra.mxu0 %v966
        %v1056 = vpop.f32.mrf.mxu0
        %v1057 = vadd.f32 0.0, %v1056
        %v1058 = vpop.f32.mrf.mxu0
        %1059 = vmatprep.mubr.f32.mxu0 0.0
        %1060 = vmatmul.mubr.f32.gmra.mxu0 %v967
        %v1061 = vpop.f32.mrf.mxu0
        %v1062 = vadd.f32 0.0, %v1061
        %v1063 = vpop.f32.mrf.mxu0
        %1064 = vmatprep.mubr.f32.mxu0 0.0
        %1065 = vmatmul.mubr.f32.gmra.mxu0 %v968
        %v1066 = vpop.f32.mrf.mxu0
        %v1067 = vadd.f32 0.0, %v1066
        %v1068 = vpop.f32.mrf.mxu0
        %1069 = vmatprep.mubr.f32.mxu0 0.0
        %1070 = vmatmul.mubr.f32.gmra.mxu0 %v969
        %v1071 = vpop.f32.mrf.mxu0
        %v1072 = vadd.f32 0.0, %v1071
        %v1073 = vpop.f32.mrf.mxu0
        %1074 = vdwg.mxu0
        %v1075 = vsel %vm922, %v1037, -1e+30
        %v1076 = vsel %vm923, %v1042, -1e+30
        %v1077 = vsel %vm924, %v1047, -1e+30
        %v1078 = vsel %vm925, %v1052, -1e+30
        %v1079 = vsel %vm926, %v1057, -1e+30
        %v1080 = vsel %vm927, %v1062, -1e+30
        %v1081 = vsel %vm928, %v1067, -1e+30
        %v1082 = vsel %vm929, %v1072, -1e+30
        %1083 = vmax.xlane.f32.xlu0 %v1075
        %v1084 = vpop.xlane.xlu0 %1083
        %1085 = vmax.xlane.f32.xlu0 %v1076
        %v1086 = vpop.xlane.xlu0 %1085
        %1087 = vmax.xlane.f32.xlu0 %v1077
        %v1088 = vpop.xlane.xlu0 %1087
        %1089 = vmax.xlane.f32.xlu0 %v1078
        %v1090 = vpop.xlane.xlu0 %1089
        %1091 = vmax.xlane.f32.xlu0 %v1079
        %v1092 = vpop.xlane.xlu0 %1091
        %1093 = vmax.xlane.f32.xlu0 %v1080
        %v1094 = vpop.xlane.xlu0 %1093
        %1095 = vmax.xlane.f32.xlu0 %v1081
        %v1096 = vpop.xlane.xlu0 %1095
        %1097 = vmax.xlane.f32.xlu0 %v1082
        %v1098 = vpop.xlane.xlu0 %1097
        %v1099 = vsub.f32 %v1075, %v1084
        %v1100 = vsub.f32 %v1076, %v1086
        %v1101 = vsub.f32 %v1077, %v1088
        %v1102 = vsub.f32 %v1078, %v1090
        %v1103 = vsub.f32 %v1079, %v1092
        %v1104 = vsub.f32 %v1080, %v1094
        %v1105 = vsub.f32 %v1081, %v1096
        %v1106 = vsub.f32 %v1082, %v1098
        %v1107 = vmul.f32 %v1099, 1.442695
        %v1108 = vpow.pop %v1107
        %v1109 = vmul.f32 %v1100, 1.442695
        %v1110 = vpow.pop %v1109
        %v1111 = vmul.f32 %v1101, 1.442695
        %v1112 = vpow.pop %v1111
        %v1113 = vmul.f32 %v1102, 1.442695
        %v1114 = vpow.pop %v1113
        %v1115 = vmul.f32 %v1103, 1.442695
        %v1116 = vpow.pop %v1115
        %v1117 = vmul.f32 %v1104, 1.442695
        %v1118 = vpow.pop %v1117
        %v1119 = vmul.f32 %v1105, 1.442695
        %v1120 = vpow.pop %v1119
        %v1121 = vmul.f32 %v1106, 1.442695
        %v1122 = vpow.pop %v1121
        %1123 = vadd.xlane.f32.xlu0 %v1108
        %v1124 = vpop.xlane.xlu0 %1123
        %1125 = vadd.xlane.f32.xlu0 %v1110
        %v1126 = vpop.xlane.xlu0 %1125
        %1127 = vadd.xlane.f32.xlu0 %v1112
        %v1128 = vpop.xlane.xlu0 %1127
        %1129 = vadd.xlane.f32.xlu0 %v1114
        %v1130 = vpop.xlane.xlu0 %1129
        %1131 = vadd.xlane.f32.xlu0 %v1116
        %v1132 = vpop.xlane.xlu0 %1131
        %1133 = vadd.xlane.f32.xlu0 %v1118
        %v1134 = vpop.xlane.xlu0 %1133
        %1135 = vadd.xlane.f32.xlu0 %v1120
        %v1136 = vpop.xlane.xlu0 %1135
        %1137 = vadd.xlane.f32.xlu0 %v1122
        %v1138 = vpop.xlane.xlu0 %1137
        %v1139 = vrcp.pop %v1124
        %v1140 = vrcp.pop %v1126
        %v1141 = vrcp.pop %v1128
        %v1142 = vrcp.pop %v1130
        %v1143 = vrcp.pop %v1132
        %v1144 = vrcp.pop %v1134
        %v1145 = vrcp.pop %v1136
        %v1146 = vrcp.pop %v1138
        %v1147 = vmul.f32 %v1108, %v1139
        %v1148 = vmul.f32 %v1110, %v1140
        %v1149 = vmul.f32 %v1112, %v1141
        %v1150 = vmul.f32 %v1114, %v1142
        %v1151 = vmul.f32 %v1116, %v1143
        %v1152 = vmul.f32 %v1118, %v1144
        %v1153 = vmul.f32 %v1120, %v1145
        %v1154 = vmul.f32 %v1122, %v1146
        %1155 = vmatprep.subr.mxu0 0.0
        %1156 = vmatpush1.msra.mxu0 %v770
        %1157 = vmatprep.subr.mxu0 0.0
        %1158 = vmatpush1.msra.mxu0 %v764
        %1159 = vmatprep.subr.mxu0 0.0
        %1160 = vmatpush1.msra.mxu0 %v758
        %1161 = vmatprep.subr.mxu0 0.0
        %1162 = vmatpush1.msra.mxu0 %v752
        %1163 = vmatprep.subr.mxu0 0.0
        %1164 = vmatpush1.msra.mxu0 %v746
        %1165 = vmatprep.subr.mxu0 0.0
        %1166 = vmatpush1.msra.mxu0 %v740
        %1167 = vmatprep.subr.mxu0 0.0
        %1168 = vmatpush1.msra.mxu0 %v734
        %1169 = vmatprep.subr.mxu0 0.0
        %1170 = vmatpush1.msra.mxu0 %v728
        %1171 = vmatprep.subr.mxu0 0.0
        %1172 = vmatpush1.msra.mxu0 %v722
        %1173 = vmatprep.subr.mxu0 0.0
        %1174 = vmatpush1.msra.mxu0 %v716
        %1175 = vmatprep.subr.mxu0 0.0
        %1176 = vmatpush1.msra.mxu0 %v710
        %1177 = vmatprep.subr.mxu0 0.0
        %1178 = vmatpush1.msra.mxu0 %v704
        %1179 = vmatprep.subr.mxu0 0.0
        %1180 = vmatpush1.msra.mxu0 %v698
        %1181 = vmatprep.subr.mxu0 0.0
        %1182 = vmatpush1.msra.mxu0 %v692
        %1183 = vmatprep.subr.mxu0 0.0
        %1184 = vmatpush1.msra.mxu0 %v686
        %1185 = vmatprep.subr.mxu0 0.0
        %1186 = vmatpush1.msra.mxu0 %v680
        %1187 = vmatprep.subr.mxu0 0.0
        %1188 = vmatpush2.msra.mxu0 0.0
        %1189 = vmatprep.subr.mxu0 0.0
        %1190 = vmatpush2.msra.mxu0 0.0
        %1191 = vmatprep.subr.mxu0 0.0
        %1192 = vmatpush2.msra.mxu0 0.0
        %1193 = vmatprep.subr.mxu0 0.0
        %1194 = vmatpush2.msra.mxu0 0.0
        %1195 = vmatprep.subr.mxu0 0.0
        %1196 = vmatpush2.msra.mxu0 0.0
        %1197 = vmatprep.subr.mxu0 0.0
        %1198 = vmatpush2.msra.mxu0 0.0
        %1199 = vmatprep.subr.mxu0 0.0
        %1200 = vmatpush2.msra.mxu0 0.0
        %1201 = vmatprep.subr.mxu0 0.0
        %1202 = vmatpush2.msra.mxu0 0.0
        %1203 = vmatprep.subr.mxu0 0.0
        %1204 = vmatpush2.msra.mxu0 0.0
        %1205 = vmatprep.subr.mxu0 0.0
        %1206 = vmatpush2.msra.mxu0 0.0
        %1207 = vmatprep.subr.mxu0 0.0
        %1208 = vmatpush2.msra.mxu0 0.0
        %1209 = vmatprep.subr.mxu0 0.0
        %1210 = vmatpush2.msra.mxu0 0.0
        %1211 = vmatprep.subr.mxu0 0.0
        %1212 = vmatpush2.msra.mxu0 0.0
        %1213 = vmatprep.subr.mxu0 0.0
        %1214 = vmatpush2.msra.mxu0 0.0
        %1215 = vmatprep.subr.mxu0 0.0
        %1216 = vmatpush2.msra.mxu0 0.0
        %1217 = vmatprep.subr.mxu0 0.0
        %1218 = vmatpush2.msra.mxu0 0.0
        %1219 = vmatprep.mubr.f32.mxu0 0.0
        %1220 = vmatmul.mubr.f32.gmra.mxu0 %v1147
        %v1221 = vpop.f32.mrf.mxu0
        %v1222 = vadd.f32 0.0, %v1221
        %v1223 = vpop.f32.mrf.mxu0
        %1224 = vmatprep.mubr.f32.mxu0 0.0
        %1225 = vmatmul.mubr.f32.gmra.mxu0 %v1148
        %v1226 = vpop.f32.mrf.mxu0
        %v1227 = vadd.f32 0.0, %v1226
        %v1228 = vpop.f32.mrf.mxu0
        %1229 = vmatprep.mubr.f32.mxu0 0.0
        %1230 = vmatmul.mubr.f32.gmra.mxu0 %v1149
        %v1231 = vpop.f32.mrf.mxu0
        %v1232 = vadd.f32 0.0, %v1231
        %v1233 = vpop.f32.mrf.mxu0
        %1234 = vmatprep.mubr.f32.mxu0 0.0
        %1235 = vmatmul.mubr.f32.gmra.mxu0 %v1150
        %v1236 = vpop.f32.mrf.mxu0
        %v1237 = vadd.f32 0.0, %v1236
        %v1238 = vpop.f32.mrf.mxu0
        %1239 = vmatprep.mubr.f32.mxu0 0.0
        %1240 = vmatmul.mubr.f32.gmra.mxu0 %v1151
        %v1241 = vpop.f32.mrf.mxu0
        %v1242 = vadd.f32 0.0, %v1241
        %v1243 = vpop.f32.mrf.mxu0
        %1244 = vmatprep.mubr.f32.mxu0 0.0
        %1245 = vmatmul.mubr.f32.gmra.mxu0 %v1152
        %v1246 = vpop.f32.mrf.mxu0
        %v1247 = vadd.f32 0.0, %v1246
        %v1248 = vpop.f32.mrf.mxu0
        %1249 = vmatprep.mubr.f32.mxu0 0.0
        %1250 = vmatmul.mubr.f32.gmra.mxu0 %v1153
        %v1251 = vpop.f32.mrf.mxu0
        %v1252 = vadd.f32 0.0, %v1251
        %v1253 = vpop.f32.mrf.mxu0
        %1254 = vmatprep.mubr.f32.mxu0 0.0
        %1255 = vmatmul.mubr.f32.gmra.mxu0 %v1154
        %v1256 = vpop.f32.mrf.mxu0
        %v1257 = vadd.f32 0.0, %v1256
        %v1258 = vpop.f32.mrf.mxu0
        %1259 = vdwg.mxu0
        %v1260 = vld [vmem:[#allocation7] sm:$0xff]
        %v1261 = vld [vmem:[#allocation7 + $0x8] sm:$0xff]
        %v1262 = vld [vmem:[#allocation7 + $0x10] sm:$0xff]
        %v1263 = vld [vmem:[#allocation7 + $0x18] sm:$0xff]
        %v1264 = vld [vmem:[#allocation7 + $0x20] sm:$0xff]
        %v1265 = vld [vmem:[#allocation7 + $0x28] sm:$0xff]
        %v1266 = vld [vmem:[#allocation7 + $0x30] sm:$0xff]
        %v1267 = vld [vmem:[#allocation7 + $0x38] sm:$0xff]
        %v1268 = vld [vmem:[#allocation7 + $0x40] sm:$0xff]
        %v1269 = vld [vmem:[#allocation7 + $0x48] sm:$0xff]
        %v1270 = vld [vmem:[#allocation7 + $0x50] sm:$0xff]
        %v1271 = vld [vmem:[#allocation7 + $0x58] sm:$0xff]
        %v1272 = vld [vmem:[#allocation7 + $0x60] sm:$0xff]
        %v1273 = vld [vmem:[#allocation7 + $0x68] sm:$0xff]
        %v1274 = vld [vmem:[#allocation7 + $0x70] sm:$0xff]
        %v1275 = vld [vmem:[#allocation7 + $0x78] sm:$0xff]
        %v1276 = vld [vmem:[#allocation7 + $0x80] sm:$0xff]
        %v1277 = vld [vmem:[#allocation7 + $0x88] sm:$0xff]
        %v1278 = vld [vmem:[#allocation7 + $0x90] sm:$0xff]
        %v1279 = vld [vmem:[#allocation7 + $0x98] sm:$0xff]
        %v1280 = vld [vmem:[#allocation7 + $0xa0] sm:$0xff]
        %v1281 = vld [vmem:[#allocation7 + $0xa8] sm:$0xff]
        %v1282 = vld [vmem:[#allocation7 + $0xb0] sm:$0xff]
        %v1283 = vld [vmem:[#allocation7 + $0xb8] sm:$0xff]
        %v1284 = vld [vmem:[#allocation7 + $0xc0] sm:$0xff]
        %v1285 = vld [vmem:[#allocation7 + $0xc8] sm:$0xff]
        %v1286 = vld [vmem:[#allocation7 + $0xd0] sm:$0xff]
        %v1287 = vld [vmem:[#allocation7 + $0xd8] sm:$0xff]
        %v1288 = vld [vmem:[#allocation7 + $0xe0] sm:$0xff]
        %v1289 = vld [vmem:[#allocation7 + $0xe8] sm:$0xff]
        %v1290 = vld [vmem:[#allocation7 + $0xf0] sm:$0xff]
        %v1291 = vld [vmem:[#allocation7 + $0xf8] sm:$0xff]
        %v1292 = vmul.f32 %v567, %v805
        %v1293 = vmul.f32 %v573, %v806
        %v1294 = vmul.f32 %v579, %v807
        %v1295 = vmul.f32 %v585, %v808
        %v1296 = vmul.f32 %v591, %v809
        %v1297 = vmul.f32 %v597, %v810
        %v1298 = vmul.f32 %v603, %v811
        %v1299 = vmul.f32 %v609, %v812
        %1300 = vrot.lane.b32.xlu0 %v567, 64
        %v1301 = vpop.permute.xlu0 %1300
        %1302 = vrot.lane.b32.xlu0 %v573, 64
        %v1303 = vpop.permute.xlu0 %1302
        %1304 = vrot.lane.b32.xlu0 %v579, 64
        %v1305 = vpop.permute.xlu0 %1304
        %1306 = vrot.lane.b32.xlu0 %v585, 64
        %v1307 = vpop.permute.xlu0 %1306
        %1308 = vrot.lane.b32.xlu0 %v591, 64
        %v1309 = vpop.permute.xlu0 %1308
        %1310 = vrot.lane.b32.xlu0 %v597, 64
        %v1311 = vpop.permute.xlu0 %1310
        %1312 = vrot.lane.b32.xlu0 %v603, 64
        %v1313 = vpop.permute.xlu0 %1312
        %1314 = vrot.lane.b32.xlu0 %v609, 64
        %v1315 = vpop.permute.xlu0 %1314
        %v1316 = vmul.f32 %v1301, %v814
        %v1317 = vmul.f32 %v1303, %v815
        %v1318 = vmul.f32 %v1305, %v816
        %v1319 = vmul.f32 %v1307, %v817
        %v1320 = vmul.f32 %v1309, %v818
        %v1321 = vmul.f32 %v1311, %v819
        %v1322 = vmul.f32 %v1313, %v820
        %v1323 = vmul.f32 %v1315, %v821
        %v1324 = vadd.f32 %v1292, %v1316
        %v1325 = vadd.f32 %v1293, %v1317
        %v1326 = vadd.f32 %v1294, %v1318
        %v1327 = vadd.f32 %v1295, %v1319
        %v1328 = vadd.f32 %v1296, %v1320
        %v1329 = vadd.f32 %v1297, %v1321
        %v1330 = vadd.f32 %v1298, %v1322
        %v1331 = vadd.f32 %v1299, %v1323
        %1332 = vmatprep.subr.mxu0 0.0
        %1333 = vmatpush1.xpose.msra.mxu0 %v901
        %1334 = vmatprep.subr.mxu0 0.0
        %1335 = vmatpush1.xpose.msra.mxu0 %v900
        %1336 = vmatprep.subr.mxu0 0.0
        %1337 = vmatpush1.xpose.msra.mxu0 %v899
        %1338 = vmatprep.subr.mxu0 0.0
        %1339 = vmatpush1.xpose.msra.mxu0 %v898
        %1340 = vmatprep.subr.mxu0 0.0
        %1341 = vmatpush1.xpose.msra.mxu0 %v897
        %1342 = vmatprep.subr.mxu0 0.0
        %1343 = vmatpush1.xpose.msra.mxu0 %v896
        %1344 = vmatprep.subr.mxu0 0.0
        %1345 = vmatpush1.xpose.msra.mxu0 %v895
        %1346 = vmatprep.subr.mxu0 0.0
        %1347 = vmatpush1.xpose.msra.mxu0 %v894
        %1348 = vmatprep.subr.mxu0 0.0
        %1349 = vmatpush1.xpose.msra.mxu0 %v893
        %1350 = vmatprep.subr.mxu0 0.0
        %1351 = vmatpush1.xpose.msra.mxu0 %v892
        %1352 = vmatprep.subr.mxu0 0.0
        %1353 = vmatpush1.xpose.msra.mxu0 %v891
        %1354 = vmatprep.subr.mxu0 0.0
        %1355 = vmatpush1.xpose.msra.mxu0 %v890
        %1356 = vmatprep.subr.mxu0 0.0
        %1357 = vmatpush1.xpose.msra.mxu0 %v889
        %1358 = vmatprep.subr.mxu0 0.0
        %1359 = vmatpush1.xpose.msra.mxu0 %v888
        %1360 = vmatprep.subr.mxu0 0.0
        %1361 = vmatpush1.xpose.msra.mxu0 %v887
        %1362 = vmatprep.subr.mxu0 0.0
        %1363 = vmatpush1.xpose.msra.mxu0 %v886
        %1364 = vmatprep.subr.mxu0 0.0
        %1365 = vmatpush2.xpose.msra.mxu0 0.0
        %1366 = vmatprep.subr.mxu0 0.0
        %1367 = vmatpush2.xpose.msra.mxu0 0.0
        %1368 = vmatprep.subr.mxu0 0.0
        %1369 = vmatpush2.xpose.msra.mxu0 0.0
        %1370 = vmatprep.subr.mxu0 0.0
        %1371 = vmatpush2.xpose.msra.mxu0 0.0
        %1372 = vmatprep.subr.mxu0 0.0
        %1373 = vmatpush2.xpose.msra.mxu0 0.0
        %1374 = vmatprep.subr.mxu0 0.0
        %1375 = vmatpush2.xpose.msra.mxu0 0.0
        %1376 = vmatprep.subr.mxu0 0.0
        %1377 = vmatpush2.xpose.msra.mxu0 0.0
        %1378 = vmatprep.subr.mxu0 0.0
        %1379 = vmatpush2.xpose.msra.mxu0 0.0
        %1380 = vmatprep.subr.mxu0 0.0
        %1381 = vmatpush2.xpose.msra.mxu0 0.0
        %1382 = vmatprep.subr.mxu0 0.0
        %1383 = vmatpush2.xpose.msra.mxu0 0.0
        %1384 = vmatprep.subr.mxu0 0.0
        %1385 = vmatpush2.xpose.msra.mxu0 0.0
        %1386 = vmatprep.subr.mxu0 0.0
        %1387 = vmatpush2.xpose.msra.mxu0 0.0
        %1388 = vmatprep.subr.mxu0 0.0
        %1389 = vmatpush2.xpose.msra.mxu0 0.0
        %1390 = vmatprep.subr.mxu0 0.0
        %1391 = vmatpush2.xpose.msra.mxu0 0.0
        %1392 = vmatprep.subr.mxu0 0.0
        %1393 = vmatpush2.xpose.msra.mxu0 0.0
        %1394 = vmatprep.subr.mxu0 0.0
        %1395 = vmatpush2.xpose.msra.mxu0 0.0
        %1396 = vmatprep.mubr.f32.mxu0 0.0
        %1397 = vmatmul.mubr.f32.gmra.mxu0 %v1324
        %v1398 = vpop.f32.mrf.mxu0
        %v1399 = vadd.f32 0.0, %v1398
        %v1400 = vpop.f32.mrf.mxu0
        %1401 = vmatprep.mubr.f32.mxu0 0.0
        %1402 = vmatmul.mubr.f32.gmra.mxu0 %v1325
        %v1403 = vpop.f32.mrf.mxu0
        %v1404 = vadd.f32 0.0, %v1403
        %v1405 = vpop.f32.mrf.mxu0
        %1406 = vmatprep.mubr.f32.mxu0 0.0
        %1407 = vmatmul.mubr.f32.gmra.mxu0 %v1326
        %v1408 = vpop.f32.mrf.mxu0
        %v1409 = vadd.f32 0.0, %v1408
        %v1410 = vpop.f32.mrf.mxu0
        %1411 = vmatprep.mubr.f32.mxu0 0.0
        %1412 = vmatmul.mubr.f32.gmra.mxu0 %v1327
        %v1413 = vpop.f32.mrf.mxu0
        %v1414 = vadd.f32 0.0, %v1413
        %v1415 = vpop.f32.mrf.mxu0
        %1416 = vmatprep.mubr.f32.mxu0 0.0
        %1417 = vmatmul.mubr.f32.gmra.mxu0 %v1328
        %v1418 = vpop.f32.mrf.mxu0
        %v1419 = vadd.f32 0.0, %v1418
        %v1420 = vpop.f32.mrf.mxu0
        %1421 = vmatprep.mubr.f32.mxu0 0.0
        %1422 = vmatmul.mubr.f32.gmra.mxu0 %v1329
        %v1423 = vpop.f32.mrf.mxu0
        %v1424 = vadd.f32 0.0, %v1423
        %v1425 = vpop.f32.mrf.mxu0
        %1426 = vmatprep.mubr.f32.mxu0 0.0
        %1427 = vmatmul.mubr.f32.gmra.mxu0 %v1330
        %v1428 = vpop.f32.mrf.mxu0
        %v1429 = vadd.f32 0.0, %v1428
        %v1430 = vpop.f32.mrf.mxu0
        %1431 = vmatprep.mubr.f32.mxu0 0.0
        %1432 = vmatmul.mubr.f32.gmra.mxu0 %v1331
        %v1433 = vpop.f32.mrf.mxu0
        %v1434 = vadd.f32 0.0, %v1433
        %v1435 = vpop.f32.mrf.mxu0
        %1436 = vdwg.mxu0
        %v1437 = vsel %vm922, %v1399, -1e+30
        %v1438 = vsel %vm923, %v1404, -1e+30
        %v1439 = vsel %vm924, %v1409, -1e+30
        %v1440 = vsel %vm925, %v1414, -1e+30
        %v1441 = vsel %vm926, %v1419, -1e+30
        %v1442 = vsel %vm927, %v1424, -1e+30
        %v1443 = vsel %vm928, %v1429, -1e+30
        %v1444 = vsel %vm929, %v1434, -1e+30
        %1445 = vmax.xlane.f32.xlu0 %v1437
        %v1446 = vpop.xlane.xlu0 %1445
        %1447 = vmax.xlane.f32.xlu0 %v1438
        %v1448 = vpop.xlane.xlu0 %1447
        %1449 = vmax.xlane.f32.xlu0 %v1439
        %v1450 = vpop.xlane.xlu0 %1449
        %1451 = vmax.xlane.f32.xlu0 %v1440
        %v1452 = vpop.xlane.xlu0 %1451
        %1453 = vmax.xlane.f32.xlu0 %v1441
        %v1454 = vpop.xlane.xlu0 %1453
        %1455 = vmax.xlane.f32.xlu0 %v1442
        %v1456 = vpop.xlane.xlu0 %1455
        %1457 = vmax.xlane.f32.xlu0 %v1443
        %v1458 = vpop.xlane.xlu0 %1457
        %1459 = vmax.xlane.f32.xlu0 %v1444
        %v1460 = vpop.xlane.xlu0 %1459
        %v1461 = vsub.f32 %v1437, %v1446
        %v1462 = vsub.f32 %v1438, %v1448
        %v1463 = vsub.f32 %v1439, %v1450
        %v1464 = vsub.f32 %v1440, %v1452
        %v1465 = vsub.f32 %v1441, %v1454
        %v1466 = vsub.f32 %v1442, %v1456
        %v1467 = vsub.f32 %v1443, %v1458
        %v1468 = vsub.f32 %v1444, %v1460
        %v1469 = vmul.f32 %v1461, 1.442695
        %v1470 = vpow.pop %v1469
        %v1471 = vmul.f32 %v1462, 1.442695
        %v1472 = vpow.pop %v1471
        %v1473 = vmul.f32 %v1463, 1.442695
        %v1474 = vpow.pop %v1473
        %v1475 = vmul.f32 %v1464, 1.442695
        %v1476 = vpow.pop %v1475
        %v1477 = vmul.f32 %v1465, 1.442695
        %v1478 = vpow.pop %v1477
        %v1479 = vmul.f32 %v1466, 1.442695
        %v1480 = vpow.pop %v1479
        %v1481 = vmul.f32 %v1467, 1.442695
        %v1482 = vpow.pop %v1481
        %v1483 = vmul.f32 %v1468, 1.442695
        %v1484 = vpow.pop %v1483
        %1485 = vadd.xlane.f32.xlu0 %v1470
        %v1486 = vpop.xlane.xlu0 %1485
        %1487 = vadd.xlane.f32.xlu0 %v1472
        %v1488 = vpop.xlane.xlu0 %1487
        %1489 = vadd.xlane.f32.xlu0 %v1474
        %v1490 = vpop.xlane.xlu0 %1489
        %1491 = vadd.xlane.f32.xlu0 %v1476
        %v1492 = vpop.xlane.xlu0 %1491
        %1493 = vadd.xlane.f32.xlu0 %v1478
        %v1494 = vpop.xlane.xlu0 %1493
        %1495 = vadd.xlane.f32.xlu0 %v1480
        %v1496 = vpop.xlane.xlu0 %1495
        %1497 = vadd.xlane.f32.xlu0 %v1482
        %v1498 = vpop.xlane.xlu0 %1497
        %1499 = vadd.xlane.f32.xlu0 %v1484
        %v1500 = vpop.xlane.xlu0 %1499
        %v1501 = vrcp.pop %v1486
        %v1502 = vrcp.pop %v1488
        %v1503 = vrcp.pop %v1490
        %v1504 = vrcp.pop %v1492
        %v1505 = vrcp.pop %v1494
        %v1506 = vrcp.pop %v1496
        %v1507 = vrcp.pop %v1498
        %v1508 = vrcp.pop %v1500
        %v1509 = vmul.f32 %v1470, %v1501
        %v1510 = vmul.f32 %v1472, %v1502
        %v1511 = vmul.f32 %v1474, %v1503
        %v1512 = vmul.f32 %v1476, %v1504
        %v1513 = vmul.f32 %v1478, %v1505
        %v1514 = vmul.f32 %v1480, %v1506
        %v1515 = vmul.f32 %v1482, %v1507
        %v1516 = vmul.f32 %v1484, %v1508
        %1517 = vmatprep.subr.mxu0 0.0
        %1518 = vmatpush1.msra.mxu0 %v770
        %1519 = vmatprep.subr.mxu0 0.0
        %1520 = vmatpush1.msra.mxu0 %v764
        %1521 = vmatprep.subr.mxu0 0.0
        %1522 = vmatpush1.msra.mxu0 %v758
        %1523 = vmatprep.subr.mxu0 0.0
        %1524 = vmatpush1.msra.mxu0 %v752
        %1525 = vmatprep.subr.mxu0 0.0
        %1526 = vmatpush1.msra.mxu0 %v746
        %1527 = vmatprep.subr.mxu0 0.0
        %1528 = vmatpush1.msra.mxu0 %v740
        %1529 = vmatprep.subr.mxu0 0.0
        %1530 = vmatpush1.msra.mxu0 %v734
        %1531 = vmatprep.subr.mxu0 0.0
        %1532 = vmatpush1.msra.mxu0 %v728
        %1533 = vmatprep.subr.mxu0 0.0
        %1534 = vmatpush1.msra.mxu0 %v722
        %1535 = vmatprep.subr.mxu0 0.0
        %1536 = vmatpush1.msra.mxu0 %v716
        %1537 = vmatprep.subr.mxu0 0.0
        %1538 = vmatpush1.msra.mxu0 %v710
        %1539 = vmatprep.subr.mxu0 0.0
        %1540 = vmatpush1.msra.mxu0 %v704
        %1541 = vmatprep.subr.mxu0 0.0
        %1542 = vmatpush1.msra.mxu0 %v698
        %1543 = vmatprep.subr.mxu0 0.0
        %1544 = vmatpush1.msra.mxu0 %v692
        %1545 = vmatprep.subr.mxu0 0.0
        %1546 = vmatpush1.msra.mxu0 %v686
        %1547 = vmatprep.subr.mxu0 0.0
        %1548 = vmatpush1.msra.mxu0 %v680
        %1549 = vmatprep.subr.mxu0 0.0
        %1550 = vmatpush2.msra.mxu0 0.0
        %1551 = vmatprep.subr.mxu0 0.0
        %1552 = vmatpush2.msra.mxu0 0.0
        %1553 = vmatprep.subr.mxu0 0.0
        %1554 = vmatpush2.msra.mxu0 0.0
        %1555 = vmatprep.subr.mxu0 0.0
        %1556 = vmatpush2.msra.mxu0 0.0
        %1557 = vmatprep.subr.mxu0 0.0
        %1558 = vmatpush2.msra.mxu0 0.0
        %1559 = vmatprep.subr.mxu0 0.0
        %1560 = vmatpush2.msra.mxu0 0.0
        %1561 = vmatprep.subr.mxu0 0.0
        %1562 = vmatpush2.msra.mxu0 0.0
        %1563 = vmatprep.subr.mxu0 0.0
        %1564 = vmatpush2.msra.mxu0 0.0
        %1565 = vmatprep.subr.mxu0 0.0
        %1566 = vmatpush2.msra.mxu0 0.0
        %1567 = vmatprep.subr.mxu0 0.0
        %1568 = vmatpush2.msra.mxu0 0.0
        %1569 = vmatprep.subr.mxu0 0.0
        %1570 = vmatpush2.msra.mxu0 0.0
        %1571 = vmatprep.subr.mxu0 0.0
        %1572 = vmatpush2.msra.mxu0 0.0
        %1573 = vmatprep.subr.mxu0 0.0
        %1574 = vmatpush2.msra.mxu0 0.0
        %1575 = vmatprep.subr.mxu0 0.0
        %1576 = vmatpush2.msra.mxu0 0.0
        %1577 = vmatprep.subr.mxu0 0.0
        %1578 = vmatpush2.msra.mxu0 0.0
        %1579 = vmatprep.subr.mxu0 0.0
        %1580 = vmatpush2.msra.mxu0 0.0
        %1581 = vmatprep.mubr.f32.mxu0 0.0
        %1582 = vmatmul.mubr.f32.gmra.mxu0 %v1509
        %v1583 = vpop.f32.mrf.mxu0
        %v1584 = vadd.f32 0.0, %v1583
        %v1585 = vpop.f32.mrf.mxu0
        %1586 = vmatprep.mubr.f32.mxu0 0.0
        %1587 = vmatmul.mubr.f32.gmra.mxu0 %v1510
        %v1588 = vpop.f32.mrf.mxu0
        %v1589 = vadd.f32 0.0, %v1588
        %v1590 = vpop.f32.mrf.mxu0
        %1591 = vmatprep.mubr.f32.mxu0 0.0
        %1592 = vmatmul.mubr.f32.gmra.mxu0 %v1511
        %v1593 = vpop.f32.mrf.mxu0
        %v1594 = vadd.f32 0.0, %v1593
        %v1595 = vpop.f32.mrf.mxu0
        %1596 = vmatprep.mubr.f32.mxu0 0.0
        %1597 = vmatmul.mubr.f32.gmra.mxu0 %v1512
        %v1598 = vpop.f32.mrf.mxu0
        %v1599 = vadd.f32 0.0, %v1598
        %v1600 = vpop.f32.mrf.mxu0
        %1601 = vmatprep.mubr.f32.mxu0 0.0
        %1602 = vmatmul.mubr.f32.gmra.mxu0 %v1513
        %v1603 = vpop.f32.mrf.mxu0
        %v1604 = vadd.f32 0.0, %v1603
        %v1605 = vpop.f32.mrf.mxu0
        %1606 = vmatprep.mubr.f32.mxu0 0.0
        %1607 = vmatmul.mubr.f32.gmra.mxu0 %v1514
        %v1608 = vpop.f32.mrf.mxu0
        %v1609 = vadd.f32 0.0, %v1608
        %v1610 = vpop.f32.mrf.mxu0
        %1611 = vmatprep.mubr.f32.mxu0 0.0
        %1612 = vmatmul.mubr.f32.gmra.mxu0 %v1515
        %v1613 = vpop.f32.mrf.mxu0
        %v1614 = vadd.f32 0.0, %v1613
        %v1615 = vpop.f32.mrf.mxu0
        %1616 = vmatprep.mubr.f32.mxu0 0.0
        %1617 = vmatmul.mubr.f32.gmra.mxu0 %v1516
        %v1618 = vpop.f32.mrf.mxu0
        %v1619 = vadd.f32 0.0, %v1618
        %v1620 = vpop.f32.mrf.mxu0
        %1621 = vdwg.mxu0
        %v1622 = vld [vmem:[#allocation7 + $0x100] sm:$0xff]
        %v1623 = vld [vmem:[#allocation7 + $0x108] sm:$0xff]
        %v1624 = vld [vmem:[#allocation7 + $0x110] sm:$0xff]
        %v1625 = vld [vmem:[#allocation7 + $0x118] sm:$0xff]
        %v1626 = vld [vmem:[#allocation7 + $0x120] sm:$0xff]
        %v1627 = vld [vmem:[#allocation7 + $0x128] sm:$0xff]
        %v1628 = vld [vmem:[#allocation7 + $0x130] sm:$0xff]
        %v1629 = vld [vmem:[#allocation7 + $0x138] sm:$0xff]
        %v1630 = vld [vmem:[#allocation7 + $0x140] sm:$0xff]
        %v1631 = vld [vmem:[#allocation7 + $0x148] sm:$0xff]
        %v1632 = vld [vmem:[#allocation7 + $0x150] sm:$0xff]
        %v1633 = vld [vmem:[#allocation7 + $0x158] sm:$0xff]
        %v1634 = vld [vmem:[#allocation7 + $0x160] sm:$0xff]
        %v1635 = vld [vmem:[#allocation7 + $0x168] sm:$0xff]
        %v1636 = vld [vmem:[#allocation7 + $0x170] sm:$0xff]
        %v1637 = vld [vmem:[#allocation7 + $0x178] sm:$0xff]
        %v1638 = vld [vmem:[#allocation7 + $0x180] sm:$0xff]
        %v1639 = vld [vmem:[#allocation7 + $0x188] sm:$0xff]
        %v1640 = vld [vmem:[#allocation7 + $0x190] sm:$0xff]
        %v1641 = vld [vmem:[#allocation7 + $0x198] sm:$0xff]
        %v1642 = vld [vmem:[#allocation7 + $0x1a0] sm:$0xff]
        %v1643 = vld [vmem:[#allocation7 + $0x1a8] sm:$0xff]
        %v1644 = vld [vmem:[#allocation7 + $0x1b0] sm:$0xff]
        %v1645 = vld [vmem:[#allocation7 + $0x1b8] sm:$0xff]
        %v1646 = vld [vmem:[#allocation7 + $0x1c0] sm:$0xff]
        %v1647 = vld [vmem:[#allocation7 + $0x1c8] sm:$0xff]
        %v1648 = vld [vmem:[#allocation7 + $0x1d0] sm:$0xff]
        %v1649 = vld [vmem:[#allocation7 + $0x1d8] sm:$0xff]
        %v1650 = vld [vmem:[#allocation7 + $0x1e0] sm:$0xff]
        %v1651 = vld [vmem:[#allocation7 + $0x1e8] sm:$0xff]
        %v1652 = vld [vmem:[#allocation7 + $0x1f0] sm:$0xff]
        %v1653 = vld [vmem:[#allocation7 + $0x1f8] sm:$0xff]
        %1654 = vmatprep.subr.mxu0 %v1653
        %1655 = vmatpush1.msra.mxu0 %v1652
        %1656 = vmatprep.subr.mxu0 %v1651
        %1657 = vmatpush1.msra.mxu0 %v1650
        %1658 = vmatprep.subr.mxu0 %v1649
        %1659 = vmatpush1.msra.mxu0 %v1648
        %1660 = vmatprep.subr.mxu0 %v1647
        %1661 = vmatpush1.msra.mxu0 %v1646
        %1662 = vmatprep.subr.mxu0 %v1645
        %1663 = vmatpush1.msra.mxu0 %v1644
        %1664 = vmatprep.subr.mxu0 %v1643
        %1665 = vmatpush1.msra.mxu0 %v1642
        %1666 = vmatprep.subr.mxu0 %v1641
        %1667 = vmatpush1.msra.mxu0 %v1640
        %1668 = vmatprep.subr.mxu0 %v1639
        %1669 = vmatpush1.msra.mxu0 %v1638
        %1670 = vmatprep.subr.mxu0 %v1637
        %1671 = vmatpush1.msra.mxu0 %v1636
        %1672 = vmatprep.subr.mxu0 %v1635
        %1673 = vmatpush1.msra.mxu0 %v1634
        %1674 = vmatprep.subr.mxu0 %v1633
        %1675 = vmatpush1.msra.mxu0 %v1632
        %1676 = vmatprep.subr.mxu0 %v1631
        %1677 = vmatpush1.msra.mxu0 %v1630
        %1678 = vmatprep.subr.mxu0 %v1629
        %1679 = vmatpush1.msra.mxu0 %v1628
        %1680 = vmatprep.subr.mxu0 %v1627
        %1681 = vmatpush1.msra.mxu0 %v1626
        %1682 = vmatprep.subr.mxu0 %v1625
        %1683 = vmatpush1.msra.mxu0 %v1624
        %1684 = vmatprep.subr.mxu0 %v1623
        %1685 = vmatpush1.msra.mxu0 %v1622
        %1686 = vmatprep.subr.mxu0 0.0
        %1687 = vmatpush2.msra.mxu0 0.0
        %1688 = vmatprep.subr.mxu0 0.0
        %1689 = vmatpush2.msra.mxu0 0.0
        %1690 = vmatprep.subr.mxu0 0.0
        %1691 = vmatpush2.msra.mxu0 0.0
        %1692 = vmatprep.subr.mxu0 0.0
        %1693 = vmatpush2.msra.mxu0 0.0
        %1694 = vmatprep.subr.mxu0 0.0
        %1695 = vmatpush2.msra.mxu0 0.0
        %1696 = vmatprep.subr.mxu0 0.0
        %1697 = vmatpush2.msra.mxu0 0.0
        %1698 = vmatprep.subr.mxu0 0.0
        %1699 = vmatpush2.msra.mxu0 0.0
        %1700 = vmatprep.subr.mxu0 0.0
        %1701 = vmatpush2.msra.mxu0 0.0
        %1702 = vmatprep.subr.mxu0 0.0
        %1703 = vmatpush2.msra.mxu0 0.0
        %1704 = vmatprep.subr.mxu0 0.0
        %1705 = vmatpush2.msra.mxu0 0.0
        %1706 = vmatprep.subr.mxu0 0.0
        %1707 = vmatpush2.msra.mxu0 0.0
        %1708 = vmatprep.subr.mxu0 0.0
        %1709 = vmatpush2.msra.mxu0 0.0
        %1710 = vmatprep.subr.mxu0 0.0
        %1711 = vmatpush2.msra.mxu0 0.0
        %1712 = vmatprep.subr.mxu0 0.0
        %1713 = vmatpush2.msra.mxu0 0.0
        %1714 = vmatprep.subr.mxu0 0.0
        %1715 = vmatpush2.msra.mxu0 0.0
        %1716 = vmatprep.subr.mxu0 0.0
        %1717 = vmatpush2.msra.mxu0 0.0
        %1718 = vmatprep.mubr.f32.mxu0 0.0
        %1719 = vmatmul.mubr.f32.gmra.mxu0 %v1584
        %v1720 = vpop.f32.mrf.mxu0
        %v1721 = vadd.f32 0.0, %v1720
        %v1722 = vpop.f32.mrf.mxu0
        %v1723 = vadd.f32 0.0, %v1722
        %1724 = vmatprep.mubr.f32.mxu0 0.0
        %1725 = vmatmul.mubr.f32.gmra.mxu0 %v1589
        %v1726 = vpop.f32.mrf.mxu0
        %v1727 = vadd.f32 0.0, %v1726
        %v1728 = vpop.f32.mrf.mxu0
        %v1729 = vadd.f32 0.0, %v1728
        %1730 = vmatprep.mubr.f32.mxu0 0.0
        %1731 = vmatmul.mubr.f32.gmra.mxu0 %v1594
        %v1732 = vpop.f32.mrf.mxu0
        %v1733 = vadd.f32 0.0, %v1732
        %v1734 = vpop.f32.mrf.mxu0
        %v1735 = vadd.f32 0.0, %v1734
        %1736 = vmatprep.mubr.f32.mxu0 0.0
        %1737 = vmatmul.mubr.f32.gmra.mxu0 %v1599
        %v1738 = vpop.f32.mrf.mxu0
        %v1739 = vadd.f32 0.0, %v1738
        %v1740 = vpop.f32.mrf.mxu0
        %v1741 = vadd.f32 0.0, %v1740
        %1742 = vmatprep.mubr.f32.mxu0 0.0
        %1743 = vmatmul.mubr.f32.gmra.mxu0 %v1604
        %v1744 = vpop.f32.mrf.mxu0
        %v1745 = vadd.f32 0.0, %v1744
        %v1746 = vpop.f32.mrf.mxu0
        %v1747 = vadd.f32 0.0, %v1746
        %1748 = vmatprep.mubr.f32.mxu0 0.0
        %1749 = vmatmul.mubr.f32.gmra.mxu0 %v1609
        %v1750 = vpop.f32.mrf.mxu0
        %v1751 = vadd.f32 0.0, %v1750
        %v1752 = vpop.f32.mrf.mxu0
        %v1753 = vadd.f32 0.0, %v1752
        %1754 = vmatprep.mubr.f32.mxu0 0.0
        %1755 = vmatmul.mubr.f32.gmra.mxu0 %v1614
        %v1756 = vpop.f32.mrf.mxu0
        %v1757 = vadd.f32 0.0, %v1756
        %v1758 = vpop.f32.mrf.mxu0
        %v1759 = vadd.f32 0.0, %v1758
        %1760 = vmatprep.mubr.f32.mxu0 0.0
        %1761 = vmatmul.mubr.f32.gmra.mxu0 %v1619
        %v1762 = vpop.f32.mrf.mxu0
        %v1763 = vadd.f32 0.0, %v1762
        %v1764 = vpop.f32.mrf.mxu0
        %v1765 = vadd.f32 0.0, %v1764
        %1766 = vdwg.mxu0
        %1767 = vmatprep.subr.mxu0 %v1291
        %1768 = vmatpush1.msra.mxu0 %v1290
        %1769 = vmatprep.subr.mxu0 %v1289
        %1770 = vmatpush1.msra.mxu0 %v1288
        %1771 = vmatprep.subr.mxu0 %v1287
        %1772 = vmatpush1.msra.mxu0 %v1286
        %1773 = vmatprep.subr.mxu0 %v1285
        %1774 = vmatpush1.msra.mxu0 %v1284
        %1775 = vmatprep.subr.mxu0 %v1283
        %1776 = vmatpush1.msra.mxu0 %v1282
        %1777 = vmatprep.subr.mxu0 %v1281
        %1778 = vmatpush1.msra.mxu0 %v1280
        %1779 = vmatprep.subr.mxu0 %v1279
        %1780 = vmatpush1.msra.mxu0 %v1278
        %1781 = vmatprep.subr.mxu0 %v1277
        %1782 = vmatpush1.msra.mxu0 %v1276
        %1783 = vmatprep.subr.mxu0 %v1275
        %1784 = vmatpush1.msra.mxu0 %v1274
        %1785 = vmatprep.subr.mxu0 %v1273
        %1786 = vmatpush1.msra.mxu0 %v1272
        %1787 = vmatprep.subr.mxu0 %v1271
        %1788 = vmatpush1.msra.mxu0 %v1270
        %1789 = vmatprep.subr.mxu0 %v1269
        %1790 = vmatpush1.msra.mxu0 %v1268
        %1791 = vmatprep.subr.mxu0 %v1267
        %1792 = vmatpush1.msra.mxu0 %v1266
        %1793 = vmatprep.subr.mxu0 %v1265
        %1794 = vmatpush1.msra.mxu0 %v1264
        %1795 = vmatprep.subr.mxu0 %v1263
        %1796 = vmatpush1.msra.mxu0 %v1262
        %1797 = vmatprep.subr.mxu0 %v1261
        %1798 = vmatpush1.msra.mxu0 %v1260
        %1799 = vmatprep.subr.mxu0 0.0
        %1800 = vmatpush2.msra.mxu0 0.0
        %1801 = vmatprep.subr.mxu0 0.0
        %1802 = vmatpush2.msra.mxu0 0.0
        %1803 = vmatprep.subr.mxu0 0.0
        %1804 = vmatpush2.msra.mxu0 0.0
        %1805 = vmatprep.subr.mxu0 0.0
        %1806 = vmatpush2.msra.mxu0 0.0
        %1807 = vmatprep.subr.mxu0 0.0
        %1808 = vmatpush2.msra.mxu0 0.0
        %1809 = vmatprep.subr.mxu0 0.0
        %1810 = vmatpush2.msra.mxu0 0.0
        %1811 = vmatprep.subr.mxu0 0.0
        %1812 = vmatpush2.msra.mxu0 0.0
        %1813 = vmatprep.subr.mxu0 0.0
        %1814 = vmatpush2.msra.mxu0 0.0
        %1815 = vmatprep.subr.mxu0 0.0
        %1816 = vmatpush2.msra.mxu0 0.0
        %1817 = vmatprep.subr.mxu0 0.0
        %1818 = vmatpush2.msra.mxu0 0.0
        %1819 = vmatprep.subr.mxu0 0.0
        %1820 = vmatpush2.msra.mxu0 0.0
        %1821 = vmatprep.subr.mxu0 0.0
        %1822 = vmatpush2.msra.mxu0 0.0
        %1823 = vmatprep.subr.mxu0 0.0
        %1824 = vmatpush2.msra.mxu0 0.0
        %1825 = vmatprep.subr.mxu0 0.0
        %1826 = vmatpush2.msra.mxu0 0.0
        %1827 = vmatprep.subr.mxu0 0.0
        %1828 = vmatpush2.msra.mxu0 0.0
        %1829 = vmatprep.subr.mxu0 0.0
        %1830 = vmatpush2.msra.mxu0 0.0
        %1831 = vmatprep.mubr.f32.mxu0 0.0
        %1832 = vmatmul.mubr.f32.gmra.mxu0 %v1222
        %v1833 = vpop.f32.mrf.mxu0
        %v1834 = vadd.f32 %v1721, %v1833
        %v1835 = vpop.f32.mrf.mxu0
        %v1836 = vadd.f32 %v1723, %v1835
        %1837 = vmatprep.mubr.f32.mxu0 0.0
        %1838 = vmatmul.mubr.f32.gmra.mxu0 %v1227
        %v1839 = vpop.f32.mrf.mxu0
        %v1840 = vadd.f32 %v1727, %v1839
        %v1841 = vpop.f32.mrf.mxu0
        %v1842 = vadd.f32 %v1729, %v1841
        %1843 = vmatprep.mubr.f32.mxu0 0.0
        %1844 = vmatmul.mubr.f32.gmra.mxu0 %v1232
        %v1845 = vpop.f32.mrf.mxu0
        %v1846 = vadd.f32 %v1733, %v1845
        %v1847 = vpop.f32.mrf.mxu0
        %v1848 = vadd.f32 %v1735, %v1847
        %1849 = vmatprep.mubr.f32.mxu0 0.0
        %1850 = vmatmul.mubr.f32.gmra.mxu0 %v1237
        %v1851 = vpop.f32.mrf.mxu0
        %v1852 = vadd.f32 %v1739, %v1851
        %v1853 = vpop.f32.mrf.mxu0
        %v1854 = vadd.f32 %v1741, %v1853
        %1855 = vmatprep.mubr.f32.mxu0 0.0
        %1856 = vmatmul.mubr.f32.gmra.mxu0 %v1242
        %v1857 = vpop.f32.mrf.mxu0
        %v1858 = vadd.f32 %v1745, %v1857
        %v1859 = vpop.f32.mrf.mxu0
        %v1860 = vadd.f32 %v1747, %v1859
        %1861 = vmatprep.mubr.f32.mxu0 0.0
        %1862 = vmatmul.mubr.f32.gmra.mxu0 %v1247
        %v1863 = vpop.f32.mrf.mxu0
        %v1864 = vadd.f32 %v1751, %v1863
        %v1865 = vpop.f32.mrf.mxu0
        %v1866 = vadd.f32 %v1753, %v1865
        %1867 = vmatprep.mubr.f32.mxu0 0.0
        %1868 = vmatmul.mubr.f32.gmra.mxu0 %v1252
        %v1869 = vpop.f32.mrf.mxu0
        %v1870 = vadd.f32 %v1757, %v1869
        %v1871 = vpop.f32.mrf.mxu0
        %v1872 = vadd.f32 %v1759, %v1871
        %1873 = vmatprep.mubr.f32.mxu0 0.0
        %1874 = vmatmul.mubr.f32.gmra.mxu0 %v1257
        %v1875 = vpop.f32.mrf.mxu0
        %v1876 = vadd.f32 %v1763, %v1875
        %v1877 = vpop.f32.mrf.mxu0
        %v1878 = vadd.f32 %v1765, %v1877
        %1879 = vdwg.mxu0
        %1880 = vst [vmem:[%s314] sm:$0xff] %v1834
        %1881 = vst [vmem:[%s314 + $0x8] sm:$0xff] %v1836
        %1882 = vst [vmem:[%s314 + $0x10] sm:$0xff] %v1840
        %1883 = vst [vmem:[%s314 + $0x18] sm:$0xff] %v1842
        %1884 = vst [vmem:[%s314 + $0x20] sm:$0xff] %v1846
        %1885 = vst [vmem:[%s314 + $0x28] sm:$0xff] %v1848
        %1886 = vst [vmem:[%s314 + $0x30] sm:$0xff] %v1852
        %1887 = vst [vmem:[%s314 + $0x38] sm:$0xff] %v1854
        %1888 = vst [vmem:[%s314 + $0x40] sm:$0xff] %v1858
        %1889 = vst [vmem:[%s314 + $0x48] sm:$0xff] %v1860
        %1890 = vst [vmem:[%s314 + $0x50] sm:$0xff] %v1864
        %1891 = vst [vmem:[%s314 + $0x58] sm:$0xff] %v1866
        %1892 = vst [vmem:[%s314 + $0x60] sm:$0xff] %v1870
        %1893 = vst [vmem:[%s314 + $0x68] sm:$0xff] %v1872
        %1894 = vst [vmem:[%s314 + $0x70] sm:$0xff] %v1876
        %1895 = vst [vmem:[%s314 + $0x78] sm:$0xff] %v1878
        %s1896 = sand.u32 %s156, 1
        %s1897 = scalar_lea.sflag [#allocation4], %s1896
        %s1898 = sand.u32 %s156, 1
        %s1899 = smul.addr %s1898, 128
        %s1900 = scalar_lea.vmem [#allocation11], %s1899
        // Predicated region
        $region61: #{llama_attention_forward.1} parent=39 // pred_check
          %p1901 = pneg %p166
        $region62: #{llama_attention_forward.1} parent=39 // pred_check_branch
          %1903 = sbr.rel (%p1901) target = $region64
        $region63: #{llama_attention_forward.1} parent=39 // pred_region
          %s1904 = smul.u32 8, %s29
          %s1906 = ssub.s32 2048, 2048
          %1907 = vsyncadd %s1897, %s1906
          %s1908 = smul.addr %s1904, 2
          %s1909 = smul.addr %s28, 32
          %s1910 = sadd.s32 %s1908, %s1909
          %s1911 = smul.addr %s1910, 128
          %s1912 = scalar_lea.hbm %s5, %s1911
          %s1913 = sshll.u32 %s1900, 4
          %s1914 = int_to_ptr.vmem [resolvable:$true] %s1913
          %1919 = dma.vmem_to_hbm [thread:$0]  %s1914, 2048, %s1912, %s1897, 256, 256, 16
        $region64: #{llama_attention_forward.1} parent=39 // pred_fallthru
          _
      $region40: #{llama_attention_forward.1} parent=5 // pred_fallthru
        _
      %p1920 = scmp.le.s32.totalorder 2, %s19
      // Predicated region
      $region65: #{llama_attention_forward.1} parent=5 // pred_check
        %p1921 = pneg %p1920
      $region66: #{llama_attention_forward.1} parent=5 // pred_check_branch
        %1923 = sbr.rel (%p1921) target = $region68
      $region67: #{llama_attention_forward.1} parent=5 // pred_region
        %s1924 = ssub.s32 %s19, 2
        // Predicated region
        $region69: #{llama_attention_forward.1} parent=67 // pred_check
          %p1925 = pneg %p172
        $region70: #{llama_attention_forward.1} parent=67 // pred_check_branch
          %1927 = sbr.rel (%p1925) target = $region72
        $region71: #{llama_attention_forward.1} parent=67 // pred_region
          %s1928 = sand.u32 %s157, 1
          %s1929 = scalar_lea.sflag [#allocation4], %s1928
          %s1930 = sand.u32 %s157, 1
          %s1931 = smul.addr %s1930, 128
          %s1932 = scalar_lea.vmem [#allocation11], %s1931
          %1933 = dma.done %s1929, 2048
        $region72: #{llama_attention_forward.1} parent=67 // pred_fallthru
          _
      $region68: #{llama_attention_forward.1} parent=5 // pred_fallthru
        _
    $region6: #{llama_attention_forward.1} parent=1 // loop_footer
      %s23 = sadd.s32 1, %s19
    $region7: #{llama_attention_forward.1} parent=1 // loop_footer_branch
      %18 = sbr.rel target = $region3
    $region8: #{llama_attention_forward.1} parent=1 // loop_exit
      _
    %1934 = vsyncpa [#allocation3], 1
    %s1935 = scalar_lea.sflag [#allocation3], 1
    %1936 = vsyncpa %s1935, 1
    %1937 = vsyncpa [#allocation6], 1
    %1938 = vsyncpa [#allocation9], 1
    %1939 = vsyncpa [#allocation4], 1
    %s1940 = scalar_lea.sflag [#allocation4], 1
    %1941 = vsyncpa %s1940, 1

</llo_original>
